<compile_context>
chip_gen: v5e
topology: v5e:2x2
jax: 0.10.0
libtpu: 0.0.40
codegen_flags: <defaults>
</compile_context>

<pallas_src>
import functools

import jax
import jax.numpy as jnp
import numpy as np
from jax.experimental import pallas as pl
from jax.experimental.pallas import tpu as pltpu


def _round_up(v, m):
    return (v + m - 1) // m * m


def _imd_kernel(x_ref, masks_ref,
                w1_ref, b1_ref, w2_ref, b2_ref, w3_ref, b3_ref,
                w4_ref, b4_ref, w5_ref, b5_ref,
                o_ref, *,
                W, HW_p, Nb, C, Cr_p, neg_slope, compute_dtype, mask_center):
    """One grid step = Nb images, folded onto lanes as (C1_p, Nb*HW_p)."""
    L = Nb * HW_p

    # Fold the sub-batch onto the lane axis (lane-aligned: HW_p % 128 == 0).
    if Nb == 1:
        x_full = x_ref[0]                                   # (C1_p, HW_p) f32
    else:
        x_full = jnp.concatenate([x_ref[n] for n in range(Nb)], axis=1)
    masks = masks_ref[...]                                  # (9, L) compute_dtype

    def lrelu(v):
        return jnp.where(v > 0, v, neg_slope * v)

    def conv3x3(inp_cd, w_ref, b_ref):
        # inp_cd: (Cin_p, L) in compute_dtype; w_ref: (Cout_p, 9*Cin_p),
        # K ordered (dy, dx, cin).  One MXU matmul per conv.
        wmat = w_ref[...]
        taps = []
        for dy in range(3):
            for dx in range(3):
                t = dy * 3 + dx
                s = (dy - 1) * W + (dx - 1)        # static flat lane offset
                if s == 0:
                    shifted = inp_cd
                else:
                    shifted = pltpu.roll(inp_cd, (-s) % L, axis=1)   # XLU vrot
                if t != 4 or mask_center:          # zero invalid/pad lanes
                    shifted = shifted * masks[t:t + 1, :]
                taps.append(shifted)
        stacked = jnp.concatenate(taps, axis=0)    # (9*Cin_p, L) compute_dtype
        out = jnp.dot(wmat, stacked, preferred_element_type=jnp.float32)
        return out + b_ref[...]                    # (Cout_p, L) f32

    # Cast once, BEFORE tap building (halves roll/mask/store traffic in bf16).
    x_cd = x_full.astype(compute_dtype)

    # c1..c4.  c1-c3 output rows: [remaining(Cr_p) | distilled(Cd_p)], all
    # slices below sublane-aligned.
    o1 = lrelu(conv3x3(x_cd, w1_ref, b1_ref))
    o2 = lrelu(conv3x3(o1[:Cr_p].astype(compute_dtype), w2_ref, b2_ref))
    o3 = lrelu(conv3x3(o2[:Cr_p].astype(compute_dtype), w3_ref, b3_ref))
    o4 = conv3x3(o3[:Cr_p].astype(compute_dtype), w4_ref, b4_ref)   # (Cd_p, L)

    # c5 (1x1 conv over [d1, d2, d3, o4]) as one matmul + f32 residual add.
    dcat = jnp.concatenate([o1[Cr_p:].astype(compute_dtype),
                            o2[Cr_p:].astype(compute_dtype),
                            o3[Cr_p:].astype(compute_dtype),
                            o4.astype(compute_dtype)], axis=0)      # (4Cd_p, L)
    fused = (jnp.dot(w5_ref[...], dcat, preferred_element_type=jnp.float32)
             + b5_ref[...] + x_full[:C])
    fused = fused.astype(o_ref.dtype)

    if Nb == 1:
        o_ref[0] = fused
    else:
        for n in range(Nb):
            o_ref[n] = fused[:, n * HW_p:(n + 1) * HW_p]


def imd_module_speed(x, params, *, neg_slope=0.05, compute_dtype=jnp.float32):
    """x: (N, C, H, W) float32 (NCHW, as PyTorch). Returns (N, C, H, W)."""
    N, C, H, W = x.shape
    Cd = C // 4
    Cr = C - Cd
    HW = H * W

    cbytes = jnp.dtype(compute_dtype).itemsize
    sub = 8 if cbytes == 4 else (32 // cbytes)    # sublane pack: f32=8, bf16=16
    HW_p = _round_up(HW, 128)                     # lane-dense spatial axis
    C1_p = _round_up(C, sub)
    Cr_p = _round_up(Cr, sub)
    Cd_p = _round_up(Cd, sub)
    mask_center = (HW_p != HW)

    (w1, b1), (w2, b2), (w3, b3), (w4, b4), (w5, b5) = params  # OIHW / (Cout,)

    def prep3(w, b, cin_p, reorder):
        # OIHW (Cout, Cin, 3, 3) -> (Cout_p, 9*cin_p), K ordered (dy, dx, cin).
        cout, cin = w.shape[0], w.shape[1]
        wp = jnp.pad(w, ((0, 0), (0, cin_p - cin), (0, 0), (0, 0)))
        wt = jnp.transpose(wp, (0, 2, 3, 1)).reshape(cout, 9 * cin_p)
        bt = b
        if reorder:
            # PyTorch rows [distilled(Cd), remaining(Cr)] ->
            # [remaining -> Cr_p (zero pad), distilled -> Cd_p (zero pad)].
            wt = jnp.concatenate(
                [jnp.pad(wt[Cd:], ((0, Cr_p - Cr), (0, 0))),
                 jnp.pad(wt[:Cd], ((0, Cd_p - Cd), (0, 0)))], axis=0)
            bt = jnp.concatenate(
                [jnp.pad(b[Cd:], (0, Cr_p - Cr)),
                 jnp.pad(b[:Cd], (0, Cd_p - Cd))])
        return wt.astype(compute_dtype), bt.reshape(-1, 1).astype(jnp.float32)

    w1t, b1t = prep3(w1, b1, C1_p, True)
    w2t, b2t = prep3(w2, b2, Cr_p, True)
    w3t, b3t = prep3(w3, b3, Cr_p, True)
    w4t, b4t = prep3(w4, b4, Cr_p, False)
    w4t = jnp.pad(w4t, ((0, Cd_p - Cd), (0, 0)))             # pad out rows
    b4t = jnp.pad(b4t, ((0, Cd_p - Cd), (0, 0)))

    # c5 1x1 conv: remap columns to the padded dcat layout (4 chunks of Cd_p).
    w5t = jnp.pad(w5.reshape(C, 4, Cd), ((0, 0), (0, 0), (0, Cd_p - Cd)))
    w5t = w5t.reshape(C, 4 * Cd_p).astype(compute_dtype)
    b5t = b5.reshape(C, 1).astype(jnp.float32)

    # Pick Nb = largest divisor of N whose per-step working set fits budget.
    def est_bytes(nb):
        L = nb * HW_p
        return ((9 * max(C1_p, Cr_p) + 4 * Cd_p + C1_p) * L * cbytes
                + (3 * (Cr_p + Cd_p) + Cd_p + 4 * C1_p) * L * 4)

    budget = 10 * 1024 * 1024
    Nb = 1
    for cand in range(N, 0, -1):
        if N % cand == 0 and est_bytes(cand) <= budget:
            Nb = cand
            break
    L = Nb * HW_p

    # Per-tap spatial validity masks over HW_p lanes (pad lanes = 0 for ALL
    # taps), tiled Nb times along lanes.
    ys = np.arange(H)[:, None]
    xs = np.arange(W)[None, :]
    masks_img = np.zeros((9, HW_p), np.float32)
    for dy in range(3):
        for dx in range(3):
            vy = (ys + dy - 1 >= 0) & (ys + dy - 1 < H)
            vx = (xs + dx - 1 >= 0) & (xs + dx - 1 < W)
            masks_img[dy * 3 + dx, :HW] = (vy & vx).astype(np.float32).reshape(-1)
    masks = jnp.asarray(np.tile(masks_img, (1, Nb))).astype(compute_dtype)

    # Lane-dense activation view, padded to (N, C1_p, HW_p).
    x2 = x.reshape(N, C, HW).astype(jnp.float32)
    if HW_p != HW:
        x2 = jnp.pad(x2, ((0, 0), (0, 0), (0, HW_p - HW)))
    if C1_p != C:
        x2 = jnp.pad(x2, ((0, 0), (0, C1_p - C), (0, 0)))

    kernel = functools.partial(
        _imd_kernel, W=W, HW_p=HW_p, Nb=Nb, C=C, Cr_p=Cr_p,
        neg_slope=neg_slope, compute_dtype=compute_dtype,
        mask_center=mask_center)

    def rep(arr):
        nd = arr.ndim
        return pl.BlockSpec(arr.shape, lambda g, _nd=nd: (0,) * _nd)

    grid_spec = pltpu.PrefetchScalarGridSpec(
        num_scalar_prefetch=0,
        grid=(N // Nb,),
        in_specs=[
            pl.BlockSpec((Nb, C1_p, HW_p), lambda g: (g, 0, 0)),
            rep(masks),
            rep(w1t), rep(b1t), rep(w2t), rep(b2t),
            rep(w3t), rep(b3t), rep(w4t), rep(b4t),
            rep(w5t), rep(b5t),
        ],
        out_specs=pl.BlockSpec((Nb, C, HW_p), lambda g: (g, 0, 0)),
    )

    out = pl.pallas_call(
        kernel,
        out_shape=jax.ShapeDtypeStruct((N, C, HW_p), jnp.float32),
        grid_spec=grid_spec,
        compiler_params=pltpu.CompilerParams(
            dimension_semantics=("parallel",),
            vmem_limit_bytes=32 * 1024 * 1024),
    )(x2, masks, w1t, b1t, w2t, b2t, w3t, b3t, w4t, b4t, w5t, b5t)

    if HW_p != HW:
        out = out[:, :, :HW]
    return out.reshape(N, C, H, W)


def _init_params(key, C):
    Cd = C // 4
    Cr = C - Cd
    ks = jax.random.split(key, 10)

    def conv_w(k, cout, cin, ksz):
        return (jax.random.normal(k, (cout, cin, ksz, ksz), jnp.float32)
                * (1.0 / np.sqrt(ksz * ksz * cin)))

    def bias(k, cout):
        return jax.random.normal(k, (cout,), jnp.float32) * 0.01

    w1, b1 = conv_w(ks[0], C, C, 3), bias(ks[1], C)
    w2, b2 = conv_w(ks[2], C, Cr, 3), bias(ks[3], C)
    w3, b3 = conv_w(ks[4], C, Cr, 3), bias(ks[5], C)
    w4, b4 = conv_w(ks[6], Cd, Cr, 3), bias(ks[7], Cd)
    w5, b5 = conv_w(ks[8], C, 4 * Cd, 1), bias(ks[9], C)
    return (w1, b1), (w2, b2), (w3, b3), (w4, b4), (w5, b5)


def _reference(x, params, neg_slope=0.05):
    """Pure-JAX NCHW reference matching the PyTorch forward."""
    (w1, b1), (w2, b2), (w3, b3), (w4, b4), (w5, b5) = params
    C = x.shape[1]
    Cd = C // 4

    def conv(v, w, b, pad):
        out = jax.lax.conv_general_dilated(
            v, w, window_strides=(1, 1), padding=[(pad, pad), (pad, pad)],
            dimension_numbers=("NCHW", "OIHW", "NCHW"))
        return out + b.reshape(1, -1, 1, 1)

    def lrelu(v):
        return jnp.where(v > 0, v, neg_slope * v)

    o1 = lrelu(conv(x, w1, b1, 1))
    d1, r1 = o1[:, :Cd], o1[:, Cd:]
    o2 = lrelu(conv(r1, w2, b2, 1))
    d2, r2 = o2[:, :Cd], o2[:, Cd:]
    o3 = lrelu(conv(r2, w3, b3, 1))
    d3, r3 = o3[:, :Cd], o3[:, Cd:]
    o4 = conv(r3, w4, b4, 1)
    cat = jnp.concatenate([d1, d2, d3, o4], axis=1)
    out = conv(cat, w5, b5, 0)
    return out + x


if __name__ == "__main__":
    # Small shapes: batch=2, in_channels=8 (distilled=2, remaining=6), 16x16.
    N, C, H, W = 2, 8, 16, 16
    key = jax.random.PRNGKey(0)
    kx, kp = jax.random.split(key)

    x = jax.random.normal(kx, (N, C, H, W), jnp.float32)   # NCHW, like PyTorch
    params = _init_params(kp, C)

    ref = jax.block_until_ready(_reference(x, params))

    # f32 path: bit-for-bit-ish against the reference.
    out = jax.block_until_ready(imd_module_speed(x, params))
    np.testing.assert_allclose(np.asarray(out), np.asarray(ref),
                               rtol=2e-4, atol=2e-4)

    # bf16 MXU path (operands bf16, accumulation/bias/lrelu/residual f32).
    out_bf16 = jax.block_until_ready(
        imd_module_speed(x, params, compute_dtype=jnp.bfloat16))
    np.testing.assert_allclose(np.asarray(out_bf16), np.asarray(ref),
                               rtol=5e-2, atol=1e-1)

    print("KERNEL_OK")
</pallas_src>

<mosaic_0001>
module attributes {stable_mosaic.version = 11 : i64} {
  func.func @_imd_kernel(%arg0: i32, %arg1: memref<2x8x256xf32, #tpu.memory_space<vmem>>, %arg2: memref<9x512xf32, #tpu.memory_space<vmem>>, %arg3: memref<16x72xf32, #tpu.memory_space<vmem>>, %arg4: memref<16x1xf32, #tpu.memory_space<vmem>>, %arg5: memref<16x72xf32, #tpu.memory_space<vmem>>, %arg6: memref<16x1xf32, #tpu.memory_space<vmem>>, %arg7: memref<16x72xf32, #tpu.memory_space<vmem>>, %arg8: memref<16x1xf32, #tpu.memory_space<vmem>>, %arg9: memref<8x72xf32, #tpu.memory_space<vmem>>, %arg10: memref<8x1xf32, #tpu.memory_space<vmem>>, %arg11: memref<8x32xf32, #tpu.memory_space<vmem>>, %arg12: memref<8x1xf32, #tpu.memory_space<vmem>>, %arg13: memref<2x8x256xf32, #tpu.memory_space<vmem>>) attributes {dimension_semantics = [#tpu.dimension_semantics<parallel>], iteration_bounds = array<i64: 1>, scalar_prefetch = 0 : i64, scratch_operands = 0 : i64, tpu.core_type = #tpu.core_type<tc>, window_params = [{transform_indices = @transform_0, window_bounds = array<i64: 2, 8, 256>}, {pipeline_mode = #tpu.pipeline_mode<synchronous>, transform_indices = @transform_1, window_bounds = array<i64: 9, 512>}, {pipeline_mode = #tpu.pipeline_mode<synchronous>, transform_indices = @transform_2, window_bounds = array<i64: 16, 72>}, {pipeline_mode = #tpu.pipeline_mode<synchronous>, transform_indices = @transform_3, window_bounds = array<i64: 16, 1>}, {pipeline_mode = #tpu.pipeline_mode<synchronous>, transform_indices = @transform_4, window_bounds = array<i64: 16, 72>}, {pipeline_mode = #tpu.pipeline_mode<synchronous>, transform_indices = @transform_5, window_bounds = array<i64: 16, 1>}, {pipeline_mode = #tpu.pipeline_mode<synchronous>, transform_indices = @transform_6, window_bounds = array<i64: 16, 72>}, {pipeline_mode = #tpu.pipeline_mode<synchronous>, transform_indices = @transform_7, window_bounds = array<i64: 16, 1>}, {pipeline_mode = #tpu.pipeline_mode<synchronous>, transform_indices = @transform_8, window_bounds = array<i64: 8, 72>}, {pipeline_mode = #tpu.pipeline_mode<synchronous>, transform_indices = @transform_9, window_bounds = array<i64: 8, 1>}, {pipeline_mode = #tpu.pipeline_mode<synchronous>, transform_indices = @transform_10, window_bounds = array<i64: 8, 32>}, {pipeline_mode = #tpu.pipeline_mode<synchronous>, transform_indices = @transform_11, window_bounds = array<i64: 8, 1>}, {transform_indices = @transform_12, window_bounds = array<i64: 2, 8, 256>}]} {
    %c0 = arith.constant 0 : index
    %c0_0 = arith.constant 0 : index
    %c0_1 = arith.constant 0 : index
    %0 = vector.load %arg1[%c0, %c0_0, %c0_1] : memref<2x8x256xf32, #tpu.memory_space<vmem>>, vector<1x8x256xf32>
    %1 = vector.shape_cast %0 : vector<1x8x256xf32> to vector<8x256xf32>
    %c1 = arith.constant 1 : index
    %c0_2 = arith.constant 0 : index
    %c0_3 = arith.constant 0 : index
    %2 = vector.load %arg1[%c1, %c0_2, %c0_3] : memref<2x8x256xf32, #tpu.memory_space<vmem>>, vector<1x8x256xf32>
    %3 = vector.shape_cast %2 : vector<1x8x256xf32> to vector<8x256xf32>
    %4 = tpu.concatenate %1, %3 in 1 : vector<8x256xf32>, vector<8x256xf32> -> vector<8x512xf32>
    %c0_4 = arith.constant 0 : index
    %c0_5 = arith.constant 0 : index
    %5 = vector.load %arg2[%c0_4, %c0_5] : memref<9x512xf32, #tpu.memory_space<vmem>>, vector<9x512xf32>
    %c0_6 = arith.constant 0 : index
    %c0_7 = arith.constant 0 : index
    %6 = vector.load %arg3[%c0_6, %c0_7] : memref<16x72xf32, #tpu.memory_space<vmem>>, vector<16x72xf32>
    %c17_i32 = arith.constant 17 : i32
    %7 = tpu.dynamic_rotate %4 by %c17_i32 dim 1 : vector<8x512xf32>, i32 -> vector<8x512xf32>
    %8 = vector.extract_strided_slice %5 {offsets = [0, 0], sizes = [1, 512], strides = [1, 1]} : vector<9x512xf32> to vector<1x512xf32>
    %9 = vector.broadcast %8 : vector<1x512xf32> to vector<8x512xf32>
    %10 = arith.mulf %7, %9 : vector<8x512xf32>
    %c16_i32 = arith.constant 16 : i32
    %11 = tpu.dynamic_rotate %4 by %c16_i32 dim 1 : vector<8x512xf32>, i32 -> vector<8x512xf32>
    %12 = vector.extract_strided_slice %5 {offsets = [1, 0], sizes = [1, 512], strides = [1, 1]} : vector<9x512xf32> to vector<1x512xf32>
    %13 = vector.broadcast %12 : vector<1x512xf32> to vector<8x512xf32>
    %14 = arith.mulf %11, %13 : vector<8x512xf32>
    %c15_i32 = arith.constant 15 : i32
    %15 = tpu.dynamic_rotate %4 by %c15_i32 dim 1 : vector<8x512xf32>, i32 -> vector<8x512xf32>
    %16 = vector.extract_strided_slice %5 {offsets = [2, 0], sizes = [1, 512], strides = [1, 1]} : vector<9x512xf32> to vector<1x512xf32>
    %17 = vector.broadcast %16 : vector<1x512xf32> to vector<8x512xf32>
    %18 = arith.mulf %15, %17 : vector<8x512xf32>
    %c1_i32 = arith.constant 1 : i32
    %19 = tpu.dynamic_rotate %4 by %c1_i32 dim 1 : vector<8x512xf32>, i32 -> vector<8x512xf32>
    %20 = vector.extract_strided_slice %5 {offsets = [3, 0], sizes = [1, 512], strides = [1, 1]} : vector<9x512xf32> to vector<1x512xf32>
    %21 = vector.broadcast %20 : vector<1x512xf32> to vector<8x512xf32>
    %22 = arith.mulf %19, %21 : vector<8x512xf32>
    %c511_i32 = arith.constant 511 : i32
    %23 = tpu.dynamic_rotate %4 by %c511_i32 dim 1 : vector<8x512xf32>, i32 -> vector<8x512xf32>
    %24 = vector.extract_strided_slice %5 {offsets = [5, 0], sizes = [1, 512], strides = [1, 1]} : vector<9x512xf32> to vector<1x512xf32>
    %25 = vector.broadcast %24 : vector<1x512xf32> to vector<8x512xf32>
    %26 = arith.mulf %23, %25 : vector<8x512xf32>
    %c497_i32 = arith.constant 497 : i32
    %27 = tpu.dynamic_rotate %4 by %c497_i32 dim 1 : vector<8x512xf32>, i32 -> vector<8x512xf32>
    %28 = vector.extract_strided_slice %5 {offsets = [6, 0], sizes = [1, 512], strides = [1, 1]} : vector<9x512xf32> to vector<1x512xf32>
    %29 = vector.broadcast %28 : vector<1x512xf32> to vector<8x512xf32>
    %30 = arith.mulf %27, %29 : vector<8x512xf32>
    %c496_i32 = arith.constant 496 : i32
    %31 = tpu.dynamic_rotate %4 by %c496_i32 dim 1 : vector<8x512xf32>, i32 -> vector<8x512xf32>
    %32 = vector.extract_strided_slice %5 {offsets = [7, 0], sizes = [1, 512], strides = [1, 1]} : vector<9x512xf32> to vector<1x512xf32>
    %33 = vector.broadcast %32 : vector<1x512xf32> to vector<8x512xf32>
    %34 = arith.mulf %31, %33 : vector<8x512xf32>
    %c495_i32 = arith.constant 495 : i32
    %35 = tpu.dynamic_rotate %4 by %c495_i32 dim 1 : vector<8x512xf32>, i32 -> vector<8x512xf32>
    %36 = vector.extract_strided_slice %5 {offsets = [8, 0], sizes = [1, 512], strides = [1, 1]} : vector<9x512xf32> to vector<1x512xf32>
    %37 = vector.broadcast %36 : vector<1x512xf32> to vector<8x512xf32>
    %38 = arith.mulf %35, %37 : vector<8x512xf32>
    %39 = tpu.concatenate %10, %14, %18, %22, %4, %26, %30, %34, %38 in 0 : vector<8x512xf32>, vector<8x512xf32>, vector<8x512xf32>, vector<8x512xf32>, vector<8x512xf32>, vector<8x512xf32>, vector<8x512xf32>, vector<8x512xf32>, vector<8x512xf32> -> vector<72x512xf32>
    %cst = arith.constant dense<0.000000e+00> : vector<16x512xf32>
    %40 = tpu.matmul %6, %39, %cst {dimension_numbers = #tpu.dot_dimension_numbers<[1], [0], [0], [1], [0, 0, 1, 1], [], []>} : vector<16x72xf32>, vector<72x512xf32>, vector<16x512xf32> -> vector<16x512xf32>
    %c0_8 = arith.constant 0 : index
    %c0_9 = arith.constant 0 : index
    %41 = vector.load %arg4[%c0_8, %c0_9] : memref<16x1xf32, #tpu.memory_space<vmem>>, vector<16x1xf32>
    %42 = vector.broadcast %41 : vector<16x1xf32> to vector<16x512xf32>
    %43 = arith.addf %40, %42 : vector<16x512xf32>
    %cst_10 = arith.constant 0.000000e+00 : f32
    %44 = vector.broadcast %cst_10 : f32 to vector<16x512xf32>
    %45 = arith.cmpf ogt, %43, %44 : vector<16x512xf32>
    %cst_11 = arith.constant 5.000000e-02 : f32
    %46 = vector.broadcast %cst_11 : f32 to vector<16x512xf32>
    %47 = arith.mulf %46, %43 : vector<16x512xf32>
    %48 = arith.select %45, %43, %47 : vector<16x512xi1>, vector<16x512xf32>
    %49 = vector.extract_strided_slice %48 {offsets = [0, 0], sizes = [8, 512], strides = [1, 1]} : vector<16x512xf32> to vector<8x512xf32>
    %c0_12 = arith.constant 0 : index
    %c0_13 = arith.constant 0 : index
    %50 = vector.load %arg5[%c0_12, %c0_13] : memref<16x72xf32, #tpu.memory_space<vmem>>, vector<16x72xf32>
    %c17_i32_14 = arith.constant 17 : i32
    %51 = tpu.dynamic_rotate %49 by %c17_i32_14 dim 1 : vector<8x512xf32>, i32 -> vector<8x512xf32>
    %52 = vector.extract_strided_slice %5 {offsets = [0, 0], sizes = [1, 512], strides = [1, 1]} : vector<9x512xf32> to vector<1x512xf32>
    %53 = vector.broadcast %52 : vector<1x512xf32> to vector<8x512xf32>
    %54 = arith.mulf %51, %53 : vector<8x512xf32>
    %c16_i32_15 = arith.constant 16 : i32
    %55 = tpu.dynamic_rotate %49 by %c16_i32_15 dim 1 : vector<8x512xf32>, i32 -> vector<8x512xf32>
    %56 = vector.extract_strided_slice %5 {offsets = [1, 0], sizes = [1, 512], strides = [1, 1]} : vector<9x512xf32> to vector<1x512xf32>
    %57 = vector.broadcast %56 : vector<1x512xf32> to vector<8x512xf32>
    %58 = arith.mulf %55, %57 : vector<8x512xf32>
    %c15_i32_16 = arith.constant 15 : i32
    %59 = tpu.dynamic_rotate %49 by %c15_i32_16 dim 1 : vector<8x512xf32>, i32 -> vector<8x512xf32>
    %60 = vector.extract_strided_slice %5 {offsets = [2, 0], sizes = [1, 512], strides = [1, 1]} : vector<9x512xf32> to vector<1x512xf32>
    %61 = vector.broadcast %60 : vector<1x512xf32> to vector<8x512xf32>
    %62 = arith.mulf %59, %61 : vector<8x512xf32>
    %c1_i32_17 = arith.constant 1 : i32
    %63 = tpu.dynamic_rotate %49 by %c1_i32_17 dim 1 : vector<8x512xf32>, i32 -> vector<8x512xf32>
    %64 = vector.extract_strided_slice %5 {offsets = [3, 0], sizes = [1, 512], strides = [1, 1]} : vector<9x512xf32> to vector<1x512xf32>
    %65 = vector.broadcast %64 : vector<1x512xf32> to vector<8x512xf32>
    %66 = arith.mulf %63, %65 : vector<8x512xf32>
    %c511_i32_18 = arith.constant 511 : i32
    %67 = tpu.dynamic_rotate %49 by %c511_i32_18 dim 1 : vector<8x512xf32>, i32 -> vector<8x512xf32>
    %68 = vector.extract_strided_slice %5 {offsets = [5, 0], sizes = [1, 512], strides = [1, 1]} : vector<9x512xf32> to vector<1x512xf32>
    %69 = vector.broadcast %68 : vector<1x512xf32> to vector<8x512xf32>
    %70 = arith.mulf %67, %69 : vector<8x512xf32>
    %c497_i32_19 = arith.constant 497 : i32
    %71 = tpu.dynamic_rotate %49 by %c497_i32_19 dim 1 : vector<8x512xf32>, i32 -> vector<8x512xf32>
    %72 = vector.extract_strided_slice %5 {offsets = [6, 0], sizes = [1, 512], strides = [1, 1]} : vector<9x512xf32> to vector<1x512xf32>
    %73 = vector.broadcast %72 : vector<1x512xf32> to vector<8x512xf32>
    %74 = arith.mulf %71, %73 : vector<8x512xf32>
    %c496_i32_20 = arith.constant 496 : i32
    %75 = tpu.dynamic_rotate %49 by %c496_i32_20 dim 1 : vector<8x512xf32>, i32 -> vector<8x512xf32>
    %76 = vector.extract_strided_slice %5 {offsets = [7, 0], sizes = [1, 512], strides = [1, 1]} : vector<9x512xf32> to vector<1x512xf32>
    %77 = vector.broadcast %76 : vector<1x512xf32> to vector<8x512xf32>
    %78 = arith.mulf %75, %77 : vector<8x512xf32>
    %c495_i32_21 = arith.constant 495 : i32
    %79 = tpu.dynamic_rotate %49 by %c495_i32_21 dim 1 : vector<8x512xf32>, i32 -> vector<8x512xf32>
    %80 = vector.extract_strided_slice %5 {offsets = [8, 0], sizes = [1, 512], strides = [1, 1]} : vector<9x512xf32> to vector<1x512xf32>
    %81 = vector.broadcast %80 : vector<1x512xf32> to vector<8x512xf32>
    %82 = arith.mulf %79, %81 : vector<8x512xf32>
    %83 = tpu.concatenate %54, %58, %62, %66, %49, %70, %74, %78, %82 in 0 : vector<8x512xf32>, vector<8x512xf32>, vector<8x512xf32>, vector<8x512xf32>, vector<8x512xf32>, vector<8x512xf32>, vector<8x512xf32>, vector<8x512xf32>, vector<8x512xf32> -> vector<72x512xf32>
    %cst_22 = arith.constant dense<0.000000e+00> : vector<16x512xf32>
    %84 = tpu.matmul %50, %83, %cst_22 {dimension_numbers = #tpu.dot_dimension_numbers<[1], [0], [0], [1], [0, 0, 1, 1], [], []>} : vector<16x72xf32>, vector<72x512xf32>, vector<16x512xf32> -> vector<16x512xf32>
    %c0_23 = arith.constant 0 : index
    %c0_24 = arith.constant 0 : index
    %85 = vector.load %arg6[%c0_23, %c0_24] : memref<16x1xf32, #tpu.memory_space<vmem>>, vector<16x1xf32>
    %86 = vector.broadcast %85 : vector<16x1xf32> to vector<16x512xf32>
    %87 = arith.addf %84, %86 : vector<16x512xf32>
    %cst_25 = arith.constant 0.000000e+00 : f32
    %88 = vector.broadcast %cst_25 : f32 to vector<16x512xf32>
    %89 = arith.cmpf ogt, %87, %88 : vector<16x512xf32>
    %cst_26 = arith.constant 5.000000e-02 : f32
    %90 = vector.broadcast %cst_26 : f32 to vector<16x512xf32>
    %91 = arith.mulf %90, %87 : vector<16x512xf32>
    %92 = arith.select %89, %87, %91 : vector<16x512xi1>, vector<16x512xf32>
    %93 = vector.extract_strided_slice %92 {offsets = [0, 0], sizes = [8, 512], strides = [1, 1]} : vector<16x512xf32> to vector<8x512xf32>
    %c0_27 = arith.constant 0 : index
    %c0_28 = arith.constant 0 : index
    %94 = vector.load %arg7[%c0_27, %c0_28] : memref<16x72xf32, #tpu.memory_space<vmem>>, vector<16x72xf32>
    %c17_i32_29 = arith.constant 17 : i32
    %95 = tpu.dynamic_rotate %93 by %c17_i32_29 dim 1 : vector<8x512xf32>, i32 -> vector<8x512xf32>
    %96 = vector.extract_strided_slice %5 {offsets = [0, 0], sizes = [1, 512], strides = [1, 1]} : vector<9x512xf32> to vector<1x512xf32>
    %97 = vector.broadcast %96 : vector<1x512xf32> to vector<8x512xf32>
    %98 = arith.mulf %95, %97 : vector<8x512xf32>
    %c16_i32_30 = arith.constant 16 : i32
    %99 = tpu.dynamic_rotate %93 by %c16_i32_30 dim 1 : vector<8x512xf32>, i32 -> vector<8x512xf32>
    %100 = vector.extract_strided_slice %5 {offsets = [1, 0], sizes = [1, 512], strides = [1, 1]} : vector<9x512xf32> to vector<1x512xf32>
    %101 = vector.broadcast %100 : vector<1x512xf32> to vector<8x512xf32>
    %102 = arith.mulf %99, %101 : vector<8x512xf32>
    %c15_i32_31 = arith.constant 15 : i32
    %103 = tpu.dynamic_rotate %93 by %c15_i32_31 dim 1 : vector<8x512xf32>, i32 -> vector<8x512xf32>
    %104 = vector.extract_strided_slice %5 {offsets = [2, 0], sizes = [1, 512], strides = [1, 1]} : vector<9x512xf32> to vector<1x512xf32>
    %105 = vector.broadcast %104 : vector<1x512xf32> to vector<8x512xf32>
    %106 = arith.mulf %103, %105 : vector<8x512xf32>
    %c1_i32_32 = arith.constant 1 : i32
    %107 = tpu.dynamic_rotate %93 by %c1_i32_32 dim 1 : vector<8x512xf32>, i32 -> vector<8x512xf32>
    %108 = vector.extract_strided_slice %5 {offsets = [3, 0], sizes = [1, 512], strides = [1, 1]} : vector<9x512xf32> to vector<1x512xf32>
    %109 = vector.broadcast %108 : vector<1x512xf32> to vector<8x512xf32>
    %110 = arith.mulf %107, %109 : vector<8x512xf32>
    %c511_i32_33 = arith.constant 511 : i32
    %111 = tpu.dynamic_rotate %93 by %c511_i32_33 dim 1 : vector<8x512xf32>, i32 -> vector<8x512xf32>
    %112 = vector.extract_strided_slice %5 {offsets = [5, 0], sizes = [1, 512], strides = [1, 1]} : vector<9x512xf32> to vector<1x512xf32>
    %113 = vector.broadcast %112 : vector<1x512xf32> to vector<8x512xf32>
    %114 = arith.mulf %111, %113 : vector<8x512xf32>
    %c497_i32_34 = arith.constant 497 : i32
    %115 = tpu.dynamic_rotate %93 by %c497_i32_34 dim 1 : vector<8x512xf32>, i32 -> vector<8x512xf32>
    %116 = vector.extract_strided_slice %5 {offsets = [6, 0], sizes = [1, 512], strides = [1, 1]} : vector<9x512xf32> to vector<1x512xf32>
    %117 = vector.broadcast %116 : vector<1x512xf32> to vector<8x512xf32>
    %118 = arith.mulf %115, %117 : vector<8x512xf32>
    %c496_i32_35 = arith.constant 496 : i32
    %119 = tpu.dynamic_rotate %93 by %c496_i32_35 dim 1 : vector<8x512xf32>, i32 -> vector<8x512xf32>
    %120 = vector.extract_strided_slice %5 {offsets = [7, 0], sizes = [1, 512], strides = [1, 1]} : vector<9x512xf32> to vector<1x512xf32>
    %121 = vector.broadcast %120 : vector<1x512xf32> to vector<8x512xf32>
    %122 = arith.mulf %119, %121 : vector<8x512xf32>
    %c495_i32_36 = arith.constant 495 : i32
    %123 = tpu.dynamic_rotate %93 by %c495_i32_36 dim 1 : vector<8x512xf32>, i32 -> vector<8x512xf32>
    %124 = vector.extract_strided_slice %5 {offsets = [8, 0], sizes = [1, 512], strides = [1, 1]} : vector<9x512xf32> to vector<1x512xf32>
    %125 = vector.broadcast %124 : vector<1x512xf32> to vector<8x512xf32>
    %126 = arith.mulf %123, %125 : vector<8x512xf32>
    %127 = tpu.concatenate %98, %102, %106, %110, %93, %114, %118, %122, %126 in 0 : vector<8x512xf32>, vector<8x512xf32>, vector<8x512xf32>, vector<8x512xf32>, vector<8x512xf32>, vector<8x512xf32>, vector<8x512xf32>, vector<8x512xf32>, vector<8x512xf32> -> vector<72x512xf32>
    %cst_37 = arith.constant dense<0.000000e+00> : vector<16x512xf32>
    %128 = tpu.matmul %94, %127, %cst_37 {dimension_numbers = #tpu.dot_dimension_numbers<[1], [0], [0], [1], [0, 0, 1, 1], [], []>} : vector<16x72xf32>, vector<72x512xf32>, vector<16x512xf32> -> vector<16x512xf32>
    %c0_38 = arith.constant 0 : index
    %c0_39 = arith.constant 0 : index
    %129 = vector.load %arg8[%c0_38, %c0_39] : memref<16x1xf32, #tpu.memory_space<vmem>>, vector<16x1xf32>
    %130 = vector.broadcast %129 : vector<16x1xf32> to vector<16x512xf32>
    %131 = arith.addf %128, %130 : vector<16x512xf32>
    %cst_40 = arith.constant 0.000000e+00 : f32
    %132 = vector.broadcast %cst_40 : f32 to vector<16x512xf32>
    %133 = arith.cmpf ogt, %131, %132 : vector<16x512xf32>
    %cst_41 = arith.constant 5.000000e-02 : f32
    %134 = vector.broadcast %cst_41 : f32 to vector<16x512xf32>
    %135 = arith.mulf %134, %131 : vector<16x512xf32>
    %136 = arith.select %133, %131, %135 : vector<16x512xi1>, vector<16x512xf32>
    %137 = vector.extract_strided_slice %136 {offsets = [0, 0], sizes = [8, 512], strides = [1, 1]} : vector<16x512xf32> to vector<8x512xf32>
    %c0_42 = arith.constant 0 : index
    %c0_43 = arith.constant 0 : index
    %138 = vector.load %arg9[%c0_42, %c0_43] : memref<8x72xf32, #tpu.memory_space<vmem>>, vector<8x72xf32>
    %c17_i32_44 = arith.constant 17 : i32
    %139 = tpu.dynamic_rotate %137 by %c17_i32_44 dim 1 : vector<8x512xf32>, i32 -> vector<8x512xf32>
    %140 = vector.extract_strided_slice %5 {offsets = [0, 0], sizes = [1, 512], strides = [1, 1]} : vector<9x512xf32> to vector<1x512xf32>
    %141 = vector.broadcast %140 : vector<1x512xf32> to vector<8x512xf32>
    %142 = arith.mulf %139, %141 : vector<8x512xf32>
    %c16_i32_45 = arith.constant 16 : i32
    %143 = tpu.dynamic_rotate %137 by %c16_i32_45 dim 1 : vector<8x512xf32>, i32 -> vector<8x512xf32>
    %144 = vector.extract_strided_slice %5 {offsets = [1, 0], sizes = [1, 512], strides = [1, 1]} : vector<9x512xf32> to vector<1x512xf32>
    %145 = vector.broadcast %144 : vector<1x512xf32> to vector<8x512xf32>
    %146 = arith.mulf %143, %145 : vector<8x512xf32>
    %c15_i32_46 = arith.constant 15 : i32
    %147 = tpu.dynamic_rotate %137 by %c15_i32_46 dim 1 : vector<8x512xf32>, i32 -> vector<8x512xf32>
    %148 = vector.extract_strided_slice %5 {offsets = [2, 0], sizes = [1, 512], strides = [1, 1]} : vector<9x512xf32> to vector<1x512xf32>
    %149 = vector.broadcast %148 : vector<1x512xf32> to vector<8x512xf32>
    %150 = arith.mulf %147, %149 : vector<8x512xf32>
    %c1_i32_47 = arith.constant 1 : i32
    %151 = tpu.dynamic_rotate %137 by %c1_i32_47 dim 1 : vector<8x512xf32>, i32 -> vector<8x512xf32>
    %152 = vector.extract_strided_slice %5 {offsets = [3, 0], sizes = [1, 512], strides = [1, 1]} : vector<9x512xf32> to vector<1x512xf32>
    %153 = vector.broadcast %152 : vector<1x512xf32> to vector<8x512xf32>
    %154 = arith.mulf %151, %153 : vector<8x512xf32>
    %c511_i32_48 = arith.constant 511 : i32
    %155 = tpu.dynamic_rotate %137 by %c511_i32_48 dim 1 : vector<8x512xf32>, i32 -> vector<8x512xf32>
    %156 = vector.extract_strided_slice %5 {offsets = [5, 0], sizes = [1, 512], strides = [1, 1]} : vector<9x512xf32> to vector<1x512xf32>
    %157 = vector.broadcast %156 : vector<1x512xf32> to vector<8x512xf32>
    %158 = arith.mulf %155, %157 : vector<8x512xf32>
    %c497_i32_49 = arith.constant 497 : i32
    %159 = tpu.dynamic_rotate %137 by %c497_i32_49 dim 1 : vector<8x512xf32>, i32 -> vector<8x512xf32>
    %160 = vector.extract_strided_slice %5 {offsets = [6, 0], sizes = [1, 512], strides = [1, 1]} : vector<9x512xf32> to vector<1x512xf32>
    %161 = vector.broadcast %160 : vector<1x512xf32> to vector<8x512xf32>
    %162 = arith.mulf %159, %161 : vector<8x512xf32>
    %c496_i32_50 = arith.constant 496 : i32
    %163 = tpu.dynamic_rotate %137 by %c496_i32_50 dim 1 : vector<8x512xf32>, i32 -> vector<8x512xf32>
    %164 = vector.extract_strided_slice %5 {offsets = [7, 0], sizes = [1, 512], strides = [1, 1]} : vector<9x512xf32> to vector<1x512xf32>
    %165 = vector.broadcast %164 : vector<1x512xf32> to vector<8x512xf32>
    %166 = arith.mulf %163, %165 : vector<8x512xf32>
    %c495_i32_51 = arith.constant 495 : i32
    %167 = tpu.dynamic_rotate %137 by %c495_i32_51 dim 1 : vector<8x512xf32>, i32 -> vector<8x512xf32>
    %168 = vector.extract_strided_slice %5 {offsets = [8, 0], sizes = [1, 512], strides = [1, 1]} : vector<9x512xf32> to vector<1x512xf32>
    %169 = vector.broadcast %168 : vector<1x512xf32> to vector<8x512xf32>
    %170 = arith.mulf %167, %169 : vector<8x512xf32>
    %171 = tpu.concatenate %142, %146, %150, %154, %137, %158, %162, %166, %170 in 0 : vector<8x512xf32>, vector<8x512xf32>, vector<8x512xf32>, vector<8x512xf32>, vector<8x512xf32>, vector<8x512xf32>, vector<8x512xf32>, vector<8x512xf32>, vector<8x512xf32> -> vector<72x512xf32>
    %cst_52 = arith.constant dense<0.000000e+00> : vector<8x512xf32>
    %172 = tpu.matmul %138, %171, %cst_52 {dimension_numbers = #tpu.dot_dimension_numbers<[1], [0], [0], [1], [0, 0, 1, 1], [], []>} : vector<8x72xf32>, vector<72x512xf32>, vector<8x512xf32> -> vector<8x512xf32>
    %c0_53 = arith.constant 0 : index
    %c0_54 = arith.constant 0 : index
    %173 = vector.load %arg10[%c0_53, %c0_54] : memref<8x1xf32, #tpu.memory_space<vmem>>, vector<8x1xf32>
    %174 = vector.broadcast %173 : vector<8x1xf32> to vector<8x512xf32>
    %175 = arith.addf %172, %174 : vector<8x512xf32>
    %176 = vector.extract_strided_slice %48 {offsets = [8, 0], sizes = [8, 512], strides = [1, 1]} : vector<16x512xf32> to vector<8x512xf32>
    %177 = vector.extract_strided_slice %92 {offsets = [8, 0], sizes = [8, 512], strides = [1, 1]} : vector<16x512xf32> to vector<8x512xf32>
    %178 = vector.extract_strided_slice %136 {offsets = [8, 0], sizes = [8, 512], strides = [1, 1]} : vector<16x512xf32> to vector<8x512xf32>
    %179 = tpu.concatenate %176, %177, %178, %175 in 0 : vector<8x512xf32>, vector<8x512xf32>, vector<8x512xf32>, vector<8x512xf32> -> vector<32x512xf32>
    %c0_55 = arith.constant 0 : index
    %c0_56 = arith.constant 0 : index
    %180 = vector.load %arg11[%c0_55, %c0_56] : memref<8x32xf32, #tpu.memory_space<vmem>>, vector<8x32xf32>
    %cst_57 = arith.constant dense<0.000000e+00> : vector<8x512xf32>
    %181 = tpu.matmul %180, %179, %cst_57 {dimension_numbers = #tpu.dot_dimension_numbers<[1], [0], [0], [1], [0, 0, 1, 1], [], []>} : vector<8x32xf32>, vector<32x512xf32>, vector<8x512xf32> -> vector<8x512xf32>
    %c0_58 = arith.constant 0 : index
    %c0_59 = arith.constant 0 : index
    %182 = vector.load %arg12[%c0_58, %c0_59] : memref<8x1xf32, #tpu.memory_space<vmem>>, vector<8x1xf32>
    %183 = vector.broadcast %182 : vector<8x1xf32> to vector<8x512xf32>
    %184 = arith.addf %181, %183 : vector<8x512xf32>
    %185 = arith.addf %184, %4 : vector<8x512xf32>
    %186 = vector.extract_strided_slice %185 {offsets = [0, 0], sizes = [8, 256], strides = [1, 1]} : vector<8x512xf32> to vector<8x256xf32>
    %c0_60 = arith.constant 0 : index
    %c0_61 = arith.constant 0 : index
    %c0_62 = arith.constant 0 : index
    %187 = vector.load %arg13[%c0_60, %c0_61, %c0_62] : memref<2x8x256xf32, #tpu.memory_space<vmem>>, vector<1x8x256xf32>
    %188 = vector.shape_cast %187 : vector<1x8x256xf32> to vector<8x256xf32>
    %189 = vector.shape_cast %186 : vector<8x256xf32> to vector<1x8x256xf32>
    tpu.vector_store %arg13[%c0_60, %c0_61, %c0_62], %189 {strides = array<i32>} : memref<2x8x256xf32, #tpu.memory_space<vmem>>, vector<1x8x256xf32>,
    %190 = vector.extract_strided_slice %185 {offsets = [0, 256], sizes = [8, 256], strides = [1, 1]} : vector<8x512xf32> to vector<8x256xf32>
    %c1_63 = arith.constant 1 : index
    %c0_64 = arith.constant 0 : index
    %c0_65 = arith.constant 0 : index
    %191 = vector.load %arg13[%c1_63, %c0_64, %c0_65] : memref<2x8x256xf32, #tpu.memory_space<vmem>>, vector<1x8x256xf32>
    %192 = vector.shape_cast %191 : vector<1x8x256xf32> to vector<8x256xf32>
    %193 = vector.shape_cast %190 : vector<8x256xf32> to vector<1x8x256xf32>
    tpu.vector_store %arg13[%c1_63, %c0_64, %c0_65], %193 {strides = array<i32>} : memref<2x8x256xf32, #tpu.memory_space<vmem>>, vector<1x8x256xf32>,
    return
  }
  func.func @transform_0(%arg0: i32) -> (i32, i32, i32) {
    %c0_i32 = arith.constant 0 : i32
    %c0_i32_0 = arith.constant 0 : i32
    %c0_i32_1 = arith.constant 0 : i32
    return %arg0, %c0_i32, %c0_i32_0 : i32, i32, i32
  }
  func.func @transform_1(%arg0: i32) -> (i32, i32) {
    %c0_i32 = arith.constant 0 : i32
    %c0_i32_0 = arith.constant 0 : i32
    %c0_i32_1 = arith.constant 0 : i32
    return %c0_i32, %c0_i32_0 : i32, i32
  }
  func.func @transform_2(%arg0: i32) -> (i32, i32) {
    %c0_i32 = arith.constant 0 : i32
    %c0_i32_0 = arith.constant 0 : i32
    %c0_i32_1 = arith.constant 0 : i32
    return %c0_i32, %c0_i32_0 : i32, i32
  }
  func.func @transform_3(%arg0: i32) -> (i32, i32) {
    %c0_i32 = arith.constant 0 : i32
    %c0_i32_0 = arith.constant 0 : i32
    %c0_i32_1 = arith.constant 0 : i32
    return %c0_i32, %c0_i32_0 : i32, i32
  }
  func.func @transform_4(%arg0: i32) -> (i32, i32) {
    %c0_i32 = arith.constant 0 : i32
    %c0_i32_0 = arith.constant 0 : i32
    %c0_i32_1 = arith.constant 0 : i32
    return %c0_i32, %c0_i32_0 : i32, i32
  }
  func.func @transform_5(%arg0: i32) -> (i32, i32) {
    %c0_i32 = arith.constant 0 : i32
    %c0_i32_0 = arith.constant 0 : i32
    %c0_i32_1 = arith.constant 0 : i32
    return %c0_i32, %c0_i32_0 : i32, i32
  }
  func.func @transform_6(%arg0: i32) -> (i32, i32) {
    %c0_i32 = arith.constant 0 : i32
    %c0_i32_0 = arith.constant 0 : i32
    %c0_i32_1 = arith.constant 0 : i32
    return %c0_i32, %c0_i32_0 : i32, i32
  }
  func.func @transform_7(%arg0: i32) -> (i32, i32) {
    %c0_i32 = arith.constant 0 : i32
    %c0_i32_0 = arith.constant 0 : i32
    %c0_i32_1 = arith.constant 0 : i32
    return %c0_i32, %c0_i32_0 : i32, i32
  }
  func.func @transform_8(%arg0: i32) -> (i32, i32) {
    %c0_i32 = arith.constant 0 : i32
    %c0_i32_0 = arith.constant 0 : i32
    %c0_i32_1 = arith.constant 0 : i32
    return %c0_i32, %c0_i32_0 : i32, i32
  }
  func.func @transform_9(%arg0: i32) -> (i32, i32) {
    %c0_i32 = arith.constant 0 : i32
    %c0_i32_0 = arith.constant 0 : i32
    %c0_i32_1 = arith.constant 0 : i32
    return %c0_i32, %c0_i32_0 : i32, i32
  }
  func.func @transform_10(%arg0: i32) -> (i32, i32) {
    %c0_i32 = arith.constant 0 : i32
    %c0_i32_0 = arith.constant 0 : i32
    %c0_i32_1 = arith.constant 0 : i32
    return %c0_i32, %c0_i32_0 : i32, i32
  }
  func.func @transform_11(%arg0: i32) -> (i32, i32) {
    %c0_i32 = arith.constant 0 : i32
    %c0_i32_0 = arith.constant 0 : i32
    %c0_i32_1 = arith.constant 0 : i32
    return %c0_i32, %c0_i32_0 : i32, i32
  }
  func.func @transform_12(%arg0: i32) -> (i32, i32, i32) {
    %c0_i32 = arith.constant 0 : i32
    %c0_i32_0 = arith.constant 0 : i32
    %c0_i32_1 = arith.constant 0 : i32
    return %arg0, %c0_i32, %c0_i32_0 : i32, i32, i32
  }
}

</mosaic_0001>

<llo_original>
// kernel: tpu_custom_call.1
$region0: #{tpu_custom_call.1}
  #allocation0 [shape = 'u32[]', space=smem, size = 0x4, offset = 0x4, fixed_abs, tag = 'smem constant byte address 0x4 - core index']
  #allocation1 [shape = 'u32[72,128]{1,0:T(1,128)}', space=vmem, size = 0x9000, scoped, tag = 'internal scratch']
  %s0 = inlined_call_operand.vmem [shape: f32[2,8,256], index: 0, kind: input, shape index: {}]
  %s1 = inlined_call_operand.hbm [shape: f32[9,512], index: 1, kind: input, shape index: {}]
  %s2 = inlined_call_operand.vmem [shape: f32[16,72], index: 2, kind: input, shape index: {}]
  %s3 = inlined_call_operand.vmem [shape: f32[16,1], index: 3, kind: input, shape index: {}]
  %s4 = inlined_call_operand.vmem [shape: f32[16,72], index: 4, kind: input, shape index: {}]
  %s5 = inlined_call_operand.vmem [shape: f32[16,1], index: 5, kind: input, shape index: {}]
  %s6 = inlined_call_operand.hbm [shape: f32[16,72], index: 6, kind: input, shape index: {}]
  %s7 = inlined_call_operand.vmem [shape: f32[16,1], index: 7, kind: input, shape index: {}]
  %s8 = inlined_call_operand.hbm [shape: f32[8,72], index: 8, kind: input, shape index: {}]
  %s9 = inlined_call_operand.vmem [shape: f32[8,1], index: 9, kind: input, shape index: {}]
  %s10 = inlined_call_operand.vmem [shape: f32[8,32], index: 10, kind: input, shape index: {}]
  %s11 = inlined_call_operand.vmem [shape: f32[8,1], index: 11, kind: input, shape index: {}]
  %s12 = inlined_call_operand.hbm [shape: f32[2,8,256], index: 12, kind: output, shape index: {}]
  %s13 = sld [smem:[#allocation0]]
  $region70: #{tpu_custom_call.1} parent=0
    _
  %s15 = ssub.s32 1, %s13
  %s16 = scalar_select 0, %s15, %s13
  $region1: #{tpu_custom_call.1} parent=0
    #allocation2 [shape = 'u8[32768]{0}', space=vmem, size = 0x8000, scoped, tag = 'input window, operand 1, single buffered']
    #allocation3 [shape = 's32[1]{0}', space=sflag, size = 0x4, scoped, tag = 'scoped memory for tpu_custom_call.1']
    #allocation4 [shape = 's32[1]{0}', space=sflag, size = 0x4, scoped, tag = 'scoped memory for tpu_custom_call.1']
    #allocation5 [shape = 'u8[8192]{0}', space=vmem, size = 0x2000, scoped, tag = 'input window, operand 6, single buffered']
    #allocation6 [shape = 's32[1]{0}', space=sflag, size = 0x4, scoped, tag = 'scoped memory for tpu_custom_call.1']
    #allocation7 [shape = 'u8[4096]{0}', space=vmem, size = 0x1000, scoped, tag = 'input window, operand 8, single buffered']
    #allocation8 [shape = 'u8[16384]{0}', space=vmem, size = 0x4000, scoped, tag = 'output window, operand 0, single buffered']
    %17 = vsyncpa [#allocation3], 0
    %18 = vsyncpa [#allocation6], 0
    %19 = vsyncpa [#allocation4], 0
    // Predicated region
    $region2: #{tpu_custom_call.1} parent=1 // pred_check
      _
    $region3: #{tpu_custom_call.1} parent=1 // pred_check_branch
      %21 = sbr.rel (0) target = $region5
    $region4: #{tpu_custom_call.1} parent=1 // pred_region
      _
    $region5: #{tpu_custom_call.1} parent=1 // pred_fallthru
      _
    // Predicated region
    $region6: #{tpu_custom_call.1} parent=1 // pred_check
      _
    $region7: #{tpu_custom_call.1} parent=1 // pred_check_branch
      %23 = sbr.rel (0) target = $region9
    $region8: #{tpu_custom_call.1} parent=1 // pred_region
      %25 = vsyncadd [#allocation3], 0
      %s26 = sshll.u32 %s1, 4
      %s27 = int_to_ptr.hbm [resolvable:$true] %s26
      %s28 = sshll.u32 [#allocation2], 4
      %s29 = int_to_ptr.vmem [resolvable:$true] %s28
      %34 = dma.hbm_to_vmem [thread:$0]  %s27, 1024, %s29, [#allocation3], 512, 512, 32
    $region9: #{tpu_custom_call.1} parent=1 // pred_fallthru
      _
    // Predicated region
    $region10: #{tpu_custom_call.1} parent=1 // pred_check
      _
    $region11: #{tpu_custom_call.1} parent=1 // pred_check_branch
      %36 = sbr.rel (0) target = $region13
    $region12: #{tpu_custom_call.1} parent=1 // pred_region
      _
    $region13: #{tpu_custom_call.1} parent=1 // pred_fallthru
      _
    // Predicated region
    $region14: #{tpu_custom_call.1} parent=1 // pred_check
      _
    $region15: #{tpu_custom_call.1} parent=1 // pred_check_branch
      %38 = sbr.rel (0) target = $region17
    $region16: #{tpu_custom_call.1} parent=1 // pred_region
      _
    $region17: #{tpu_custom_call.1} parent=1 // pred_fallthru
      _
    // Predicated region
    $region18: #{tpu_custom_call.1} parent=1 // pred_check
      _
    $region19: #{tpu_custom_call.1} parent=1 // pred_check_branch
      %40 = sbr.rel (0) target = $region21
    $region20: #{tpu_custom_call.1} parent=1 // pred_region
      _
    $region21: #{tpu_custom_call.1} parent=1 // pred_fallthru
      _
    // Predicated region
    $region22: #{tpu_custom_call.1} parent=1 // pred_check
      _
    $region23: #{tpu_custom_call.1} parent=1 // pred_check_branch
      %42 = sbr.rel (0) target = $region25
    $region24: #{tpu_custom_call.1} parent=1 // pred_region
      _
    $region25: #{tpu_custom_call.1} parent=1 // pred_fallthru
      _
    // Predicated region
    $region26: #{tpu_custom_call.1} parent=1 // pred_check
      _
    $region27: #{tpu_custom_call.1} parent=1 // pred_check_branch
      %44 = sbr.rel (0) target = $region29
    $region28: #{tpu_custom_call.1} parent=1 // pred_region
      %46 = vsyncadd [#allocation6], 0
      %s47 = sshll.u32 %s6, 4
      %s48 = int_to_ptr.hbm [resolvable:$true] %s47
      %s49 = sshll.u32 [#allocation5], 4
      %s50 = int_to_ptr.vmem [resolvable:$true] %s49
      %55 = dma.hbm_to_vmem [thread:$0]  %s48, 256, %s50, [#allocation6], 128, 128, 8
    $region29: #{tpu_custom_call.1} parent=1 // pred_fallthru
      _
    // Predicated region
    $region30: #{tpu_custom_call.1} parent=1 // pred_check
      _
    $region31: #{tpu_custom_call.1} parent=1 // pred_check_branch
      %57 = sbr.rel (0) target = $region33
    $region32: #{tpu_custom_call.1} parent=1 // pred_region
      _
    $region33: #{tpu_custom_call.1} parent=1 // pred_fallthru
      _
    // Predicated region
    $region34: #{tpu_custom_call.1} parent=1 // pred_check
      _
    $region35: #{tpu_custom_call.1} parent=1 // pred_check_branch
      %59 = sbr.rel (0) target = $region37
    $region36: #{tpu_custom_call.1} parent=1 // pred_region
      %61 = vsyncadd [#allocation6], 0
      %s63 = sshll.u32 %s8, 4
      %s64 = int_to_ptr.hbm [resolvable:$true] %s63
      %s65 = sshll.u32 [#allocation7], 4
      %s66 = int_to_ptr.vmem [resolvable:$true] %s65
      %68 = dma.hbm_to_vmem [thread:$0]  %s64, 128, %s66, [#allocation6]
    $region37: #{tpu_custom_call.1} parent=1 // pred_fallthru
      _
    // Predicated region
    $region38: #{tpu_custom_call.1} parent=1 // pred_check
      _
    $region39: #{tpu_custom_call.1} parent=1 // pred_check_branch
      %70 = sbr.rel (0) target = $region41
    $region40: #{tpu_custom_call.1} parent=1 // pred_region
      _
    $region41: #{tpu_custom_call.1} parent=1 // pred_fallthru
      _
    // Predicated region
    $region42: #{tpu_custom_call.1} parent=1 // pred_check
      _
    $region43: #{tpu_custom_call.1} parent=1 // pred_check_branch
      %72 = sbr.rel (0) target = $region45
    $region44: #{tpu_custom_call.1} parent=1 // pred_region
      _
    $region45: #{tpu_custom_call.1} parent=1 // pred_fallthru
      _
    // Predicated region
    $region46: #{tpu_custom_call.1} parent=1 // pred_check
      _
    $region47: #{tpu_custom_call.1} parent=1 // pred_check_branch
      %74 = sbr.rel (0) target = $region49
    $region48: #{tpu_custom_call.1} parent=1 // pred_region
      _
    $region49: #{tpu_custom_call.1} parent=1 // pred_fallthru
      _
    // Predicated region
    $region50: #{tpu_custom_call.1} parent=1 // pred_check
      _
    $region51: #{tpu_custom_call.1} parent=1 // pred_check_branch
      %76 = sbr.rel (0) target = $region53
    $region52: #{tpu_custom_call.1} parent=1 // pred_region
      %78 = dma.done [#allocation3], 1024
    $region53: #{tpu_custom_call.1} parent=1 // pred_fallthru
      _
    // Predicated region
    $region54: #{tpu_custom_call.1} parent=1 // pred_check
      _
    $region55: #{tpu_custom_call.1} parent=1 // pred_check_branch
      %80 = sbr.rel (0) target = $region57
    $region56: #{tpu_custom_call.1} parent=1 // pred_region
      %82 = dma.done [#allocation6], 256
    $region57: #{tpu_custom_call.1} parent=1 // pred_fallthru
      _
    // Predicated region
    $region58: #{tpu_custom_call.1} parent=1 // pred_check
      _
    $region59: #{tpu_custom_call.1} parent=1 // pred_check_branch
      %84 = sbr.rel (0) target = $region61
    $region60: #{tpu_custom_call.1} parent=1 // pred_region
      %86 = dma.done [#allocation6], 128
    $region61: #{tpu_custom_call.1} parent=1 // pred_fallthru
      _
    %v87 = vld [vmem:[%s0] sm:$0xff]
    %v88 = vld [vmem:[%s0 + $0x8] sm:$0xff]
    %s89 = scalar_lea.vmem %s0, 16
    %v90 = vld [vmem:[%s89] sm:$0xff]
    %v91 = vld [vmem:[%s89 + $0x8] sm:$0xff]
    %v92 = vld [vmem:[#allocation2] sm:$0xff]
    %v93 = vld [vmem:[#allocation2 + $0x8] sm:$0xff]
    %v94 = vld [vmem:[#allocation2 + $0x10] sm:$0xff]
    %v95 = vld [vmem:[#allocation2 + $0x18] sm:$0xff]
    %v96 = vld [vmem:[#allocation2 + $0x20] sm:$0x1]
    %v97 = vld [vmem:[#allocation2 + $0x28] sm:$0x1]
    %v98 = vld [vmem:[#allocation2 + $0x30] sm:$0x1]
    %v99 = vld [vmem:[#allocation2 + $0x38] sm:$0x1]
    %v100 = vld [vmem:[%s2] sm:$0xff]
    %v101 = vld [vmem:[%s2 + $0x8] sm:$0xff]
    %102 = vrot.lane.b32.xlu0 %v87, 17
    %v103 = vpop.permute.xlu0 %102
    %104 = vrot.lane.b32.xlu0 %v88, 17
    %v105 = vpop.permute.xlu0 %104
    %106 = vrot.lane.b32.xlu0 %v90, 17
    %v107 = vpop.permute.xlu0 %106
    %108 = vrot.lane.b32.xlu0 %v91, 17
    %v109 = vpop.permute.xlu0 %108
    %v110 = vlaneseq
    %v111 = vand.u32 %v110, 127
    %vm112 = vcmp.lt.s32.totalorder %v111, 17
    %v113 = vsel %vm112, %v107, %v109
    %v114 = vsel %vm112, %v105, %v107
    %v115 = vsel %vm112, %v103, %v105
    %v116 = vsel %vm112, %v109, %v103
    %v117 = vperm.slane %v92, 0
    %v118 = vperm.slane %v93, 0
    %v119 = vperm.slane %v94, 0
    %v120 = vperm.slane %v95, 0
    %v121 = vmul.f32 %v116, %v117
    %v122 = vmul.f32 %v115, %v118
    %v123 = vmul.f32 %v114, %v119
    %v124 = vmul.f32 %v113, %v120
    %125 = vrot.lane.b32.xlu0 %v87, 16
    %v126 = vpop.permute.xlu0 %125
    %127 = vrot.lane.b32.xlu0 %v88, 16
    %v128 = vpop.permute.xlu0 %127
    %129 = vrot.lane.b32.xlu0 %v90, 16
    %v130 = vpop.permute.xlu0 %129
    %131 = vrot.lane.b32.xlu0 %v91, 16
    %v132 = vpop.permute.xlu0 %131
    %vm133 = vcmp.lt.s32.totalorder %v111, 16
    %v134 = vsel %vm133, %v130, %v132
    %v135 = vsel %vm133, %v128, %v130
    %v136 = vsel %vm133, %v126, %v128
    %v137 = vsel %vm133, %v132, %v126
    %v138 = vperm.slane %v92, 1
    %v139 = vperm.slane %v93, 1
    %v140 = vperm.slane %v94, 1
    %v141 = vperm.slane %v95, 1
    %v142 = vmul.f32 %v137, %v138
    %v143 = vmul.f32 %v136, %v139
    %v144 = vmul.f32 %v135, %v140
    %v145 = vmul.f32 %v134, %v141
    %146 = vrot.lane.b32.xlu0 %v87, 15
    %v147 = vpop.permute.xlu0 %146
    %148 = vrot.lane.b32.xlu0 %v88, 15
    %v149 = vpop.permute.xlu0 %148
    %150 = vrot.lane.b32.xlu0 %v90, 15
    %v151 = vpop.permute.xlu0 %150
    %152 = vrot.lane.b32.xlu0 %v91, 15
    %v153 = vpop.permute.xlu0 %152
    %vm154 = vcmp.lt.s32.totalorder %v111, 15
    %v155 = vsel %vm154, %v151, %v153
    %v156 = vsel %vm154, %v149, %v151
    %v157 = vsel %vm154, %v147, %v149
    %v158 = vsel %vm154, %v153, %v147
    %v159 = vperm.slane %v92, 2
    %v160 = vperm.slane %v93, 2
    %v161 = vperm.slane %v94, 2
    %v162 = vperm.slane %v95, 2
    %v163 = vmul.f32 %v158, %v159
    %v164 = vmul.f32 %v157, %v160
    %v165 = vmul.f32 %v156, %v161
    %v166 = vmul.f32 %v155, %v162
    %167 = vrot.lane.b32.xlu0 %v87, 1
    %v168 = vpop.permute.xlu0 %167
    %169 = vrot.lane.b32.xlu0 %v88, 1
    %v170 = vpop.permute.xlu0 %169
    %171 = vrot.lane.b32.xlu0 %v90, 1
    %v172 = vpop.permute.xlu0 %171
    %173 = vrot.lane.b32.xlu0 %v91, 1
    %v174 = vpop.permute.xlu0 %173
    %vm175 = vcmp.lt.s32.totalorder %v111, 1
    %v176 = vsel %vm175, %v172, %v174
    %v177 = vsel %vm175, %v170, %v172
    %v178 = vsel %vm175, %v168, %v170
    %v179 = vsel %vm175, %v174, %v168
    %v180 = vperm.slane %v92, 3
    %v181 = vperm.slane %v93, 3
    %v182 = vperm.slane %v94, 3
    %v183 = vperm.slane %v95, 3
    %v184 = vmul.f32 %v179, %v180
    %v185 = vmul.f32 %v178, %v181
    %v186 = vmul.f32 %v177, %v182
    %v187 = vmul.f32 %v176, %v183
    %188 = vrot.lane.b32.xlu0 %v87, 127
    %v189 = vpop.permute.xlu0 %188
    %190 = vrot.lane.b32.xlu0 %v88, 127
    %v191 = vpop.permute.xlu0 %190
    %192 = vrot.lane.b32.xlu0 %v90, 127
    %v193 = vpop.permute.xlu0 %192
    %194 = vrot.lane.b32.xlu0 %v91, 127
    %v195 = vpop.permute.xlu0 %194
    %vm196 = vcmp.lt.s32.totalorder %v111, 127
    %v197 = vsel %vm196, %v193, %v195
    %v198 = vsel %vm196, %v191, %v193
    %v199 = vsel %vm196, %v189, %v191
    %v200 = vsel %vm196, %v195, %v189
    %v201 = vperm.slane %v92, 5
    %v202 = vperm.slane %v93, 5
    %v203 = vperm.slane %v94, 5
    %v204 = vperm.slane %v95, 5
    %v205 = vmul.f32 %v199, %v201
    %v206 = vmul.f32 %v198, %v202
    %v207 = vmul.f32 %v197, %v203
    %v208 = vmul.f32 %v200, %v204
    %209 = vrot.lane.b32.xlu0 %v87, 113
    %v210 = vpop.permute.xlu0 %209
    %211 = vrot.lane.b32.xlu0 %v88, 113
    %v212 = vpop.permute.xlu0 %211
    %213 = vrot.lane.b32.xlu0 %v90, 113
    %v214 = vpop.permute.xlu0 %213
    %215 = vrot.lane.b32.xlu0 %v91, 113
    %v216 = vpop.permute.xlu0 %215
    %vm217 = vcmp.lt.s32.totalorder %v111, 113
    %v218 = vsel %vm217, %v214, %v216
    %v219 = vsel %vm217, %v212, %v214
    %v220 = vsel %vm217, %v210, %v212
    %v221 = vsel %vm217, %v216, %v210
    %v222 = vperm.slane %v92, 6
    %v223 = vperm.slane %v93, 6
    %v224 = vperm.slane %v94, 6
    %v225 = vperm.slane %v95, 6
    %v226 = vmul.f32 %v220, %v222
    %v227 = vmul.f32 %v219, %v223
    %v228 = vmul.f32 %v218, %v224
    %v229 = vmul.f32 %v221, %v225
    %230 = vrot.lane.b32.xlu0 %v87, 112
    %v231 = vpop.permute.xlu0 %230
    %232 = vrot.lane.b32.xlu0 %v88, 112
    %v233 = vpop.permute.xlu0 %232
    %234 = vrot.lane.b32.xlu0 %v90, 112
    %v235 = vpop.permute.xlu0 %234
    %236 = vrot.lane.b32.xlu0 %v91, 112
    %v237 = vpop.permute.xlu0 %236
    %vm238 = vcmp.lt.s32.totalorder %v111, 112
    %v239 = vsel %vm238, %v235, %v237
    %v240 = vsel %vm238, %v233, %v235
    %v241 = vsel %vm238, %v231, %v233
    %v242 = vsel %vm238, %v237, %v231
    %v243 = vperm.slane %v92, 7
    %v244 = vperm.slane %v93, 7
    %v245 = vperm.slane %v94, 7
    %v246 = vperm.slane %v95, 7
    %v247 = vmul.f32 %v241, %v243
    %v248 = vmul.f32 %v240, %v244
    %v249 = vmul.f32 %v239, %v245
    %v250 = vmul.f32 %v242, %v246
    %251 = vrot.lane.b32.xlu0 %v87, 111
    %v252 = vpop.permute.xlu0 %251
    %253 = vrot.lane.b32.xlu0 %v88, 111
    %v254 = vpop.permute.xlu0 %253
    %255 = vrot.lane.b32.xlu0 %v90, 111
    %v256 = vpop.permute.xlu0 %255
    %257 = vrot.lane.b32.xlu0 %v91, 111
    %v258 = vpop.permute.xlu0 %257
    %vm259 = vcmp.lt.s32.totalorder %v111, 111
    %v260 = vsel %vm259, %v256, %v258
    %v261 = vsel %vm259, %v254, %v256
    %v262 = vsel %vm259, %v252, %v254
    %v263 = vsel %vm259, %v258, %v252
    %v264 = vperm.slane %v96, 0
    %v265 = vperm.slane %v97, 0
    %v266 = vperm.slane %v98, 0
    %v267 = vperm.slane %v99, 0
    %v268 = vmul.f32 %v262, %v264
    %v269 = vmul.f32 %v261, %v265
    %v270 = vmul.f32 %v260, %v266
    %v271 = vmul.f32 %v263, %v267
    %v272 = vld [vmem:[%s3] sm:$0xff]
    %v273 = vld [vmem:[%s3 + $0x8] sm:$0xff]
    %275 = vset.pattern.permute.xlu0 0
    %276 = vperm.xlu0 %275, %v272
    %v277 = vpop.permute.xlu0 %276
    %280 = vset.pattern.permute.xlu0 0
    %281 = vperm.xlu0 %280, %v273
    %v282 = vpop.permute.xlu0 %281
    %vm284 = vcmask 588800
    %v286 = vsel %vm284, %v100, 0
    %v289 = vsel %vm284, %v101, 0
    %291 = vmatpush.msra.mxu0 0.0
    %292 = vmatpush.msra.mxu0 0.0
    %293 = vmatpush.msra.mxu0 0.0
    %294 = vmatpush.msra.mxu0 0.0
    %295 = vmatpush.msra.mxu0 0.0
    %296 = vmatpush.msra.mxu0 0.0
    %297 = vmatpush.msra.mxu0 0.0
    %298 = vmatpush.msra.mxu0 %v268
    %299 = vmatpush.msra.mxu0 %v247
    %300 = vmatpush.msra.mxu0 %v226
    %301 = vmatpush.msra.mxu0 %v205
    %302 = vmatpush.msra.mxu0 %v87
    %303 = vmatpush.msra.mxu0 %v184
    %304 = vmatpush.msra.mxu0 %v163
    %305 = vmatpush.msra.mxu0 %v142
    %306 = vmatpush.msra.mxu0 %v121
    %307 = vmatmul.f32.gmra.mxu0 %v286
    %v308 = vpop.f32.mrf.mxu0
    %v309 = vadd.f32 %v277, %v308
    %310 = vmatmul.f32.gmra.mxu0 %v289
    %v311 = vpop.f32.mrf.mxu0
    %v312 = vadd.f32 %v282, %v311
    %313 = vdwg.mxu0
    %314 = vmatpush.msra.mxu0 0.0
    %315 = vmatpush.msra.mxu0 0.0
    %316 = vmatpush.msra.mxu0 0.0
    %317 = vmatpush.msra.mxu0 0.0
    %318 = vmatpush.msra.mxu0 0.0
    %319 = vmatpush.msra.mxu0 0.0
    %320 = vmatpush.msra.mxu0 0.0
    %321 = vmatpush.msra.mxu0 %v269
    %322 = vmatpush.msra.mxu0 %v248
    %323 = vmatpush.msra.mxu0 %v227
    %324 = vmatpush.msra.mxu0 %v206
    %325 = vmatpush.msra.mxu0 %v88
    %326 = vmatpush.msra.mxu0 %v185
    %327 = vmatpush.msra.mxu0 %v164
    %328 = vmatpush.msra.mxu0 %v143
    %329 = vmatpush.msra.mxu0 %v122
    %330 = vmatmul.f32.gmra.mxu0 %v286
    %v331 = vpop.f32.mrf.mxu0
    %v332 = vadd.f32 %v277, %v331
    %333 = vmatmul.f32.gmra.mxu0 %v289
    %v334 = vpop.f32.mrf.mxu0
    %v335 = vadd.f32 %v282, %v334
    %336 = vdwg.mxu0
    %337 = vmatpush.msra.mxu0 0.0
    %338 = vmatpush.msra.mxu0 0.0
    %339 = vmatpush.msra.mxu0 0.0
    %340 = vmatpush.msra.mxu0 0.0
    %341 = vmatpush.msra.mxu0 0.0
    %342 = vmatpush.msra.mxu0 0.0
    %343 = vmatpush.msra.mxu0 0.0
    %344 = vmatpush.msra.mxu0 %v270
    %345 = vmatpush.msra.mxu0 %v249
    %346 = vmatpush.msra.mxu0 %v228
    %347 = vmatpush.msra.mxu0 %v207
    %348 = vmatpush.msra.mxu0 %v90
    %349 = vmatpush.msra.mxu0 %v186
    %350 = vmatpush.msra.mxu0 %v165
    %351 = vmatpush.msra.mxu0 %v144
    %352 = vmatpush.msra.mxu0 %v123
    %353 = vmatmul.f32.gmra.mxu0 %v286
    %v354 = vpop.f32.mrf.mxu0
    %v355 = vadd.f32 %v277, %v354
    %356 = vmatmul.f32.gmra.mxu0 %v289
    %v357 = vpop.f32.mrf.mxu0
    %v358 = vadd.f32 %v282, %v357
    %359 = vdwg.mxu0
    %360 = vmatpush.msra.mxu0 0.0
    %361 = vmatpush.msra.mxu0 0.0
    %362 = vmatpush.msra.mxu0 0.0
    %363 = vmatpush.msra.mxu0 0.0
    %364 = vmatpush.msra.mxu0 0.0
    %365 = vmatpush.msra.mxu0 0.0
    %366 = vmatpush.msra.mxu0 0.0
    %367 = vmatpush.msra.mxu0 %v271
    %368 = vmatpush.msra.mxu0 %v250
    %369 = vmatpush.msra.mxu0 %v229
    %370 = vmatpush.msra.mxu0 %v208
    %371 = vmatpush.msra.mxu0 %v91
    %372 = vmatpush.msra.mxu0 %v187
    %373 = vmatpush.msra.mxu0 %v166
    %374 = vmatpush.msra.mxu0 %v145
    %375 = vmatpush.msra.mxu0 %v124
    %376 = vmatmul.f32.gmra.mxu0 %v286
    %v377 = vpop.f32.mrf.mxu0
    %v378 = vadd.f32 %v277, %v377
    %379 = vmatmul.f32.gmra.mxu0 %v289
    %v380 = vpop.f32.mrf.mxu0
    %v381 = vadd.f32 %v282, %v380
    %382 = vdwg.mxu0
    %vm383 = vcmp.gt.f32.partialorder %v309, 0.0
    %vm384 = vcmp.gt.f32.partialorder %v332, 0.0
    %vm385 = vcmp.gt.f32.partialorder %v355, 0.0
    %vm386 = vcmp.gt.f32.partialorder %v378, 0.0
    %vm387 = vcmp.gt.f32.partialorder %v312, 0.0
    %vm388 = vcmp.gt.f32.partialorder %v335, 0.0
    %vm389 = vcmp.gt.f32.partialorder %v358, 0.0
    %vm390 = vcmp.gt.f32.partialorder %v381, 0.0
    %v391 = vmul.f32 %v309, 0.05
    %v392 = vmul.f32 %v332, 0.05
    %v393 = vmul.f32 %v355, 0.05
    %v394 = vmul.f32 %v378, 0.05
    %v395 = vmul.f32 %v312, 0.05
    %v396 = vmul.f32 %v335, 0.05
    %v397 = vmul.f32 %v358, 0.05
    %v398 = vmul.f32 %v381, 0.05
    %v399 = vsel %vm383, %v309, %v391
    %v400 = vsel %vm384, %v332, %v392
    %v401 = vsel %vm385, %v355, %v393
    %v402 = vsel %vm386, %v378, %v394
    %v403 = vsel %vm387, %v312, %v395
    %v404 = vsel %vm388, %v335, %v396
    %v405 = vsel %vm389, %v358, %v397
    %v406 = vsel %vm390, %v381, %v398
    %v407 = vld [vmem:[%s4] sm:$0xff]
    %v408 = vld [vmem:[%s4 + $0x8] sm:$0xff]
    %409 = vrot.lane.b32.xlu0 %v399, 17
    %v410 = vpop.permute.xlu0 %409
    %411 = vrot.lane.b32.xlu0 %v400, 17
    %v412 = vpop.permute.xlu0 %411
    %413 = vrot.lane.b32.xlu0 %v401, 17
    %v414 = vpop.permute.xlu0 %413
    %415 = vrot.lane.b32.xlu0 %v402, 17
    %v416 = vpop.permute.xlu0 %415
    %v417 = vsel %vm112, %v414, %v416
    %v418 = vsel %vm112, %v412, %v414
    %v419 = vsel %vm112, %v410, %v412
    %v420 = vsel %vm112, %v416, %v410
    %v421 = vmul.f32 %v420, %v117
    %v422 = vmul.f32 %v419, %v118
    %v423 = vmul.f32 %v418, %v119
    %v424 = vmul.f32 %v417, %v120
    %425 = vrot.lane.b32.xlu0 %v399, 16
    %v426 = vpop.permute.xlu0 %425
    %427 = vrot.lane.b32.xlu0 %v400, 16
    %v428 = vpop.permute.xlu0 %427
    %429 = vrot.lane.b32.xlu0 %v401, 16
    %v430 = vpop.permute.xlu0 %429
    %431 = vrot.lane.b32.xlu0 %v402, 16
    %v432 = vpop.permute.xlu0 %431
    %v433 = vsel %vm133, %v430, %v432
    %v434 = vsel %vm133, %v428, %v430
    %v435 = vsel %vm133, %v426, %v428
    %v436 = vsel %vm133, %v432, %v426
    %v437 = vmul.f32 %v436, %v138
    %v438 = vmul.f32 %v435, %v139
    %v439 = vmul.f32 %v434, %v140
    %v440 = vmul.f32 %v433, %v141
    %441 = vrot.lane.b32.xlu0 %v399, 15
    %v442 = vpop.permute.xlu0 %441
    %443 = vrot.lane.b32.xlu0 %v400, 15
    %v444 = vpop.permute.xlu0 %443
    %445 = vrot.lane.b32.xlu0 %v401, 15
    %v446 = vpop.permute.xlu0 %445
    %447 = vrot.lane.b32.xlu0 %v402, 15
    %v448 = vpop.permute.xlu0 %447
    %v449 = vsel %vm154, %v446, %v448
    %v450 = vsel %vm154, %v444, %v446
    %v451 = vsel %vm154, %v442, %v444
    %v452 = vsel %vm154, %v448, %v442
    %v453 = vmul.f32 %v452, %v159
    %v454 = vmul.f32 %v451, %v160
    %v455 = vmul.f32 %v450, %v161
    %v456 = vmul.f32 %v449, %v162
    %457 = vrot.lane.b32.xlu0 %v399, 1
    %v458 = vpop.permute.xlu0 %457
    %459 = vrot.lane.b32.xlu0 %v400, 1
    %v460 = vpop.permute.xlu0 %459
    %461 = vrot.lane.b32.xlu0 %v401, 1
    %v462 = vpop.permute.xlu0 %461
    %463 = vrot.lane.b32.xlu0 %v402, 1
    %v464 = vpop.permute.xlu0 %463
    %v465 = vsel %vm175, %v462, %v464
    %v466 = vsel %vm175, %v460, %v462
    %v467 = vsel %vm175, %v458, %v460
    %v468 = vsel %vm175, %v464, %v458
    %v469 = vmul.f32 %v468, %v180
    %v470 = vmul.f32 %v467, %v181
    %v471 = vmul.f32 %v466, %v182
    %v472 = vmul.f32 %v465, %v183
    %473 = vrot.lane.b32.xlu0 %v399, 127
    %v474 = vpop.permute.xlu0 %473
    %475 = vrot.lane.b32.xlu0 %v400, 127
    %v476 = vpop.permute.xlu0 %475
    %477 = vrot.lane.b32.xlu0 %v401, 127
    %v478 = vpop.permute.xlu0 %477
    %479 = vrot.lane.b32.xlu0 %v402, 127
    %v480 = vpop.permute.xlu0 %479
    %v481 = vsel %vm196, %v478, %v480
    %v482 = vsel %vm196, %v476, %v478
    %v483 = vsel %vm196, %v474, %v476
    %v484 = vsel %vm196, %v480, %v474
    %v485 = vmul.f32 %v483, %v201
    %v486 = vmul.f32 %v482, %v202
    %v487 = vmul.f32 %v481, %v203
    %v488 = vmul.f32 %v484, %v204
    %489 = vrot.lane.b32.xlu0 %v399, 113
    %v490 = vpop.permute.xlu0 %489
    %491 = vrot.lane.b32.xlu0 %v400, 113
    %v492 = vpop.permute.xlu0 %491
    %493 = vrot.lane.b32.xlu0 %v401, 113
    %v494 = vpop.permute.xlu0 %493
    %495 = vrot.lane.b32.xlu0 %v402, 113
    %v496 = vpop.permute.xlu0 %495
    %v497 = vsel %vm217, %v494, %v496
    %v498 = vsel %vm217, %v492, %v494
    %v499 = vsel %vm217, %v490, %v492
    %v500 = vsel %vm217, %v496, %v490
    %v501 = vmul.f32 %v499, %v222
    %v502 = vmul.f32 %v498, %v223
    %v503 = vmul.f32 %v497, %v224
    %v504 = vmul.f32 %v500, %v225
    %505 = vrot.lane.b32.xlu0 %v399, 112
    %v506 = vpop.permute.xlu0 %505
    %507 = vrot.lane.b32.xlu0 %v400, 112
    %v508 = vpop.permute.xlu0 %507
    %509 = vrot.lane.b32.xlu0 %v401, 112
    %v510 = vpop.permute.xlu0 %509
    %511 = vrot.lane.b32.xlu0 %v402, 112
    %v512 = vpop.permute.xlu0 %511
    %v513 = vsel %vm238, %v510, %v512
    %v514 = vsel %vm238, %v508, %v510
    %v515 = vsel %vm238, %v506, %v508
    %v516 = vsel %vm238, %v512, %v506
    %v517 = vmul.f32 %v515, %v243
    %v518 = vmul.f32 %v514, %v244
    %v519 = vmul.f32 %v513, %v245
    %v520 = vmul.f32 %v516, %v246
    %521 = vrot.lane.b32.xlu0 %v399, 111
    %v522 = vpop.permute.xlu0 %521
    %523 = vrot.lane.b32.xlu0 %v400, 111
    %v524 = vpop.permute.xlu0 %523
    %525 = vrot.lane.b32.xlu0 %v401, 111
    %v526 = vpop.permute.xlu0 %525
    %527 = vrot.lane.b32.xlu0 %v402, 111
    %v528 = vpop.permute.xlu0 %527
    %v529 = vsel %vm259, %v526, %v528
    %v530 = vsel %vm259, %v524, %v526
    %v531 = vsel %vm259, %v522, %v524
    %v532 = vsel %vm259, %v528, %v522
    %v533 = vmul.f32 %v531, %v264
    %v534 = vmul.f32 %v530, %v265
    %v535 = vmul.f32 %v529, %v266
    %v536 = vmul.f32 %v532, %v267
    %v537 = vld [vmem:[%s5] sm:$0xff]
    %v538 = vld [vmem:[%s5 + $0x8] sm:$0xff]
    %540 = vset.pattern.permute.xlu0 0
    %541 = vperm.xlu0 %540, %v537
    %v542 = vpop.permute.xlu0 %541
    %545 = vset.pattern.permute.xlu0 0
    %546 = vperm.xlu0 %545, %v538
    %v547 = vpop.permute.xlu0 %546
    %v550 = vsel %vm284, %v407, 0
    %v553 = vsel %vm284, %v408, 0
    %555 = vmatpush.msra.mxu0 0.0
    %556 = vmatpush.msra.mxu0 0.0
    %557 = vmatpush.msra.mxu0 0.0
    %558 = vmatpush.msra.mxu0 0.0
    %559 = vmatpush.msra.mxu0 0.0
    %560 = vmatpush.msra.mxu0 0.0
    %561 = vmatpush.msra.mxu0 0.0
    %562 = vmatpush.msra.mxu0 %v533
    %563 = vmatpush.msra.mxu0 %v517
    %564 = vmatpush.msra.mxu0 %v501
    %565 = vmatpush.msra.mxu0 %v485
    %566 = vmatpush.msra.mxu0 %v399
    %567 = vmatpush.msra.mxu0 %v469
    %568 = vmatpush.msra.mxu0 %v453
    %569 = vmatpush.msra.mxu0 %v437
    %570 = vmatpush.msra.mxu0 %v421
    %571 = vmatmul.f32.gmra.mxu0 %v550
    %v572 = vpop.f32.mrf.mxu0
    %v573 = vadd.f32 %v542, %v572
    %574 = vmatmul.f32.gmra.mxu0 %v553
    %v575 = vpop.f32.mrf.mxu0
    %v576 = vadd.f32 %v547, %v575
    %577 = vdwg.mxu0
    %578 = vmatpush.msra.mxu0 0.0
    %579 = vmatpush.msra.mxu0 0.0
    %580 = vmatpush.msra.mxu0 0.0
    %581 = vmatpush.msra.mxu0 0.0
    %582 = vmatpush.msra.mxu0 0.0
    %583 = vmatpush.msra.mxu0 0.0
    %584 = vmatpush.msra.mxu0 0.0
    %585 = vmatpush.msra.mxu0 %v534
    %586 = vmatpush.msra.mxu0 %v518
    %587 = vmatpush.msra.mxu0 %v502
    %588 = vmatpush.msra.mxu0 %v486
    %589 = vmatpush.msra.mxu0 %v400
    %590 = vmatpush.msra.mxu0 %v470
    %591 = vmatpush.msra.mxu0 %v454
    %592 = vmatpush.msra.mxu0 %v438
    %593 = vmatpush.msra.mxu0 %v422
    %594 = vmatmul.f32.gmra.mxu0 %v550
    %v595 = vpop.f32.mrf.mxu0
    %v596 = vadd.f32 %v542, %v595
    %597 = vmatmul.f32.gmra.mxu0 %v553
    %v598 = vpop.f32.mrf.mxu0
    %v599 = vadd.f32 %v547, %v598
    %600 = vdwg.mxu0
    %601 = vmatpush.msra.mxu0 0.0
    %602 = vmatpush.msra.mxu0 0.0
    %603 = vmatpush.msra.mxu0 0.0
    %604 = vmatpush.msra.mxu0 0.0
    %605 = vmatpush.msra.mxu0 0.0
    %606 = vmatpush.msra.mxu0 0.0
    %607 = vmatpush.msra.mxu0 0.0
    %608 = vmatpush.msra.mxu0 %v535
    %609 = vmatpush.msra.mxu0 %v519
    %610 = vmatpush.msra.mxu0 %v503
    %611 = vmatpush.msra.mxu0 %v487
    %612 = vmatpush.msra.mxu0 %v401
    %613 = vmatpush.msra.mxu0 %v471
    %614 = vmatpush.msra.mxu0 %v455
    %615 = vmatpush.msra.mxu0 %v439
    %616 = vmatpush.msra.mxu0 %v423
    %617 = vmatmul.f32.gmra.mxu0 %v550
    %v618 = vpop.f32.mrf.mxu0
    %v619 = vadd.f32 %v542, %v618
    %620 = vmatmul.f32.gmra.mxu0 %v553
    %v621 = vpop.f32.mrf.mxu0
    %v622 = vadd.f32 %v547, %v621
    %623 = vdwg.mxu0
    %624 = vmatpush.msra.mxu0 0.0
    %625 = vmatpush.msra.mxu0 0.0
    %626 = vmatpush.msra.mxu0 0.0
    %627 = vmatpush.msra.mxu0 0.0
    %628 = vmatpush.msra.mxu0 0.0
    %629 = vmatpush.msra.mxu0 0.0
    %630 = vmatpush.msra.mxu0 0.0
    %631 = vmatpush.msra.mxu0 %v536
    %632 = vmatpush.msra.mxu0 %v520
    %633 = vmatpush.msra.mxu0 %v504
    %634 = vmatpush.msra.mxu0 %v488
    %635 = vmatpush.msra.mxu0 %v402
    %636 = vmatpush.msra.mxu0 %v472
    %637 = vmatpush.msra.mxu0 %v456
    %638 = vmatpush.msra.mxu0 %v440
    %639 = vmatpush.msra.mxu0 %v424
    %640 = vmatmul.f32.gmra.mxu0 %v550
    %v641 = vpop.f32.mrf.mxu0
    %v642 = vadd.f32 %v542, %v641
    %643 = vmatmul.f32.gmra.mxu0 %v553
    %v644 = vpop.f32.mrf.mxu0
    %v645 = vadd.f32 %v547, %v644
    %646 = vdwg.mxu0
    %vm647 = vcmp.gt.f32.partialorder %v573, 0.0
    %vm648 = vcmp.gt.f32.partialorder %v596, 0.0
    %vm649 = vcmp.gt.f32.partialorder %v619, 0.0
    %vm650 = vcmp.gt.f32.partialorder %v642, 0.0
    %vm651 = vcmp.gt.f32.partialorder %v576, 0.0
    %vm652 = vcmp.gt.f32.partialorder %v599, 0.0
    %vm653 = vcmp.gt.f32.partialorder %v622, 0.0
    %vm654 = vcmp.gt.f32.partialorder %v645, 0.0
    %v655 = vmul.f32 %v573, 0.05
    %v656 = vmul.f32 %v596, 0.05
    %v657 = vmul.f32 %v619, 0.05
    %v658 = vmul.f32 %v642, 0.05
    %v659 = vmul.f32 %v576, 0.05
    %v660 = vmul.f32 %v599, 0.05
    %v661 = vmul.f32 %v622, 0.05
    %v662 = vmul.f32 %v645, 0.05
    %v663 = vsel %vm647, %v573, %v655
    %v664 = vsel %vm648, %v596, %v656
    %v665 = vsel %vm649, %v619, %v657
    %v666 = vsel %vm650, %v642, %v658
    %v667 = vsel %vm651, %v576, %v659
    %v668 = vsel %vm652, %v599, %v660
    %v669 = vsel %vm653, %v622, %v661
    %v670 = vsel %vm654, %v645, %v662
    %v671 = vld [vmem:[#allocation5] sm:$0xff]
    %v672 = vld [vmem:[#allocation5 + $0x8] sm:$0xff]
    %673 = vrot.lane.b32.xlu0 %v663, 17
    %v674 = vpop.permute.xlu0 %673
    %675 = vrot.lane.b32.xlu0 %v664, 17
    %v676 = vpop.permute.xlu0 %675
    %677 = vrot.lane.b32.xlu0 %v665, 17
    %v678 = vpop.permute.xlu0 %677
    %679 = vrot.lane.b32.xlu0 %v666, 17
    %v680 = vpop.permute.xlu0 %679
    %v681 = vsel %vm112, %v678, %v680
    %v682 = vsel %vm112, %v676, %v678
    %v683 = vsel %vm112, %v674, %v676
    %v684 = vsel %vm112, %v680, %v674
    %v685 = vmul.f32 %v684, %v117
    %v686 = vmul.f32 %v683, %v118
    %v687 = vmul.f32 %v682, %v119
    %v688 = vmul.f32 %v681, %v120
    %689 = vrot.lane.b32.xlu0 %v663, 16
    %v690 = vpop.permute.xlu0 %689
    %691 = vrot.lane.b32.xlu0 %v664, 16
    %v692 = vpop.permute.xlu0 %691
    %693 = vrot.lane.b32.xlu0 %v665, 16
    %v694 = vpop.permute.xlu0 %693
    %695 = vrot.lane.b32.xlu0 %v666, 16
    %v696 = vpop.permute.xlu0 %695
    %v697 = vsel %vm133, %v694, %v696
    %v698 = vsel %vm133, %v692, %v694
    %v699 = vsel %vm133, %v690, %v692
    %v700 = vsel %vm133, %v696, %v690
    %v701 = vmul.f32 %v700, %v138
    %v702 = vmul.f32 %v699, %v139
    %v703 = vmul.f32 %v698, %v140
    %v704 = vmul.f32 %v697, %v141
    %705 = vrot.lane.b32.xlu0 %v663, 15
    %v706 = vpop.permute.xlu0 %705
    %707 = vrot.lane.b32.xlu0 %v664, 15
    %v708 = vpop.permute.xlu0 %707
    %709 = vrot.lane.b32.xlu0 %v665, 15
    %v710 = vpop.permute.xlu0 %709
    %711 = vrot.lane.b32.xlu0 %v666, 15
    %v712 = vpop.permute.xlu0 %711
    %v713 = vsel %vm154, %v710, %v712
    %v714 = vsel %vm154, %v708, %v710
    %v715 = vsel %vm154, %v706, %v708
    %v716 = vsel %vm154, %v712, %v706
    %v717 = vmul.f32 %v716, %v159
    %v718 = vmul.f32 %v715, %v160
    %v719 = vmul.f32 %v714, %v161
    %v720 = vmul.f32 %v713, %v162
    %721 = vrot.lane.b32.xlu0 %v663, 1
    %v722 = vpop.permute.xlu0 %721
    %723 = vrot.lane.b32.xlu0 %v664, 1
    %v724 = vpop.permute.xlu0 %723
    %725 = vrot.lane.b32.xlu0 %v665, 1
    %v726 = vpop.permute.xlu0 %725
    %727 = vrot.lane.b32.xlu0 %v666, 1
    %v728 = vpop.permute.xlu0 %727
    %v729 = vsel %vm175, %v726, %v728
    %v730 = vsel %vm175, %v724, %v726
    %v731 = vsel %vm175, %v722, %v724
    %v732 = vsel %vm175, %v728, %v722
    %v733 = vmul.f32 %v732, %v180
    %v734 = vmul.f32 %v731, %v181
    %v735 = vmul.f32 %v730, %v182
    %v736 = vmul.f32 %v729, %v183
    %737 = vrot.lane.b32.xlu0 %v663, 127
    %v738 = vpop.permute.xlu0 %737
    %739 = vrot.lane.b32.xlu0 %v664, 127
    %v740 = vpop.permute.xlu0 %739
    %741 = vrot.lane.b32.xlu0 %v665, 127
    %v742 = vpop.permute.xlu0 %741
    %743 = vrot.lane.b32.xlu0 %v666, 127
    %v744 = vpop.permute.xlu0 %743
    %v745 = vsel %vm196, %v742, %v744
    %v746 = vsel %vm196, %v740, %v742
    %v747 = vsel %vm196, %v738, %v740
    %v748 = vsel %vm196, %v744, %v738
    %v749 = vmul.f32 %v747, %v201
    %v750 = vmul.f32 %v746, %v202
    %v751 = vmul.f32 %v745, %v203
    %v752 = vmul.f32 %v748, %v204
    %753 = vrot.lane.b32.xlu0 %v663, 113
    %v754 = vpop.permute.xlu0 %753
    %755 = vrot.lane.b32.xlu0 %v664, 113
    %v756 = vpop.permute.xlu0 %755
    %757 = vrot.lane.b32.xlu0 %v665, 113
    %v758 = vpop.permute.xlu0 %757
    %759 = vrot.lane.b32.xlu0 %v666, 113
    %v760 = vpop.permute.xlu0 %759
    %v761 = vsel %vm217, %v758, %v760
    %v762 = vsel %vm217, %v756, %v758
    %v763 = vsel %vm217, %v754, %v756
    %v764 = vsel %vm217, %v760, %v754
    %v765 = vmul.f32 %v763, %v222
    %v766 = vmul.f32 %v762, %v223
    %v767 = vmul.f32 %v761, %v224
    %v768 = vmul.f32 %v764, %v225
    %769 = vrot.lane.b32.xlu0 %v663, 112
    %v770 = vpop.permute.xlu0 %769
    %771 = vrot.lane.b32.xlu0 %v664, 112
    %v772 = vpop.permute.xlu0 %771
    %773 = vrot.lane.b32.xlu0 %v665, 112
    %v774 = vpop.permute.xlu0 %773
    %775 = vrot.lane.b32.xlu0 %v666, 112
    %v776 = vpop.permute.xlu0 %775
    %v777 = vsel %vm238, %v774, %v776
    %v778 = vsel %vm238, %v772, %v774
    %v779 = vsel %vm238, %v770, %v772
    %v780 = vsel %vm238, %v776, %v770
    %v781 = vmul.f32 %v779, %v243
    %v782 = vmul.f32 %v778, %v244
    %v783 = vmul.f32 %v777, %v245
    %v784 = vmul.f32 %v780, %v246
    %785 = vrot.lane.b32.xlu0 %v663, 111
    %v786 = vpop.permute.xlu0 %785
    %787 = vrot.lane.b32.xlu0 %v664, 111
    %v788 = vpop.permute.xlu0 %787
    %789 = vrot.lane.b32.xlu0 %v665, 111
    %v790 = vpop.permute.xlu0 %789
    %791 = vrot.lane.b32.xlu0 %v666, 111
    %v792 = vpop.permute.xlu0 %791
    %v793 = vsel %vm259, %v790, %v792
    %v794 = vsel %vm259, %v788, %v790
    %v795 = vsel %vm259, %v786, %v788
    %v796 = vsel %vm259, %v792, %v786
    %v797 = vmul.f32 %v795, %v264
    %v798 = vmul.f32 %v794, %v265
    %v799 = vmul.f32 %v793, %v266
    %v800 = vmul.f32 %v796, %v267
    %v801 = vld [vmem:[%s7] sm:$0xff]
    %v802 = vld [vmem:[%s7 + $0x8] sm:$0xff]
    %804 = vset.pattern.permute.xlu0 0
    %805 = vperm.xlu0 %804, %v801
    %v806 = vpop.permute.xlu0 %805
    %809 = vset.pattern.permute.xlu0 0
    %810 = vperm.xlu0 %809, %v802
    %v811 = vpop.permute.xlu0 %810
    %v814 = vsel %vm284, %v671, 0
    %v817 = vsel %vm284, %v672, 0
    %819 = vmatpush.msra.mxu0 0.0
    %820 = vmatpush.msra.mxu0 0.0
    %821 = vmatpush.msra.mxu0 0.0
    %822 = vmatpush.msra.mxu0 0.0
    %823 = vmatpush.msra.mxu0 0.0
    %824 = vmatpush.msra.mxu0 0.0
    %825 = vmatpush.msra.mxu0 0.0
    %826 = vmatpush.msra.mxu0 %v797
    %827 = vmatpush.msra.mxu0 %v781
    %828 = vmatpush.msra.mxu0 %v765
    %829 = vmatpush.msra.mxu0 %v749
    %830 = vmatpush.msra.mxu0 %v663
    %831 = vmatpush.msra.mxu0 %v733
    %832 = vmatpush.msra.mxu0 %v717
    %833 = vmatpush.msra.mxu0 %v701
    %834 = vmatpush.msra.mxu0 %v685
    %835 = vmatmul.f32.gmra.mxu0 %v814
    %v836 = vpop.f32.mrf.mxu0
    %v837 = vadd.f32 %v806, %v836
    %838 = vmatmul.f32.gmra.mxu0 %v817
    %v839 = vpop.f32.mrf.mxu0
    %v840 = vadd.f32 %v811, %v839
    %841 = vdwg.mxu0
    %842 = vmatpush.msra.mxu0 0.0
    %843 = vmatpush.msra.mxu0 0.0
    %844 = vmatpush.msra.mxu0 0.0
    %845 = vmatpush.msra.mxu0 0.0
    %846 = vmatpush.msra.mxu0 0.0
    %847 = vmatpush.msra.mxu0 0.0
    %848 = vmatpush.msra.mxu0 0.0
    %849 = vmatpush.msra.mxu0 %v798
    %850 = vmatpush.msra.mxu0 %v782
    %851 = vmatpush.msra.mxu0 %v766
    %852 = vmatpush.msra.mxu0 %v750
    %853 = vmatpush.msra.mxu0 %v664
    %854 = vmatpush.msra.mxu0 %v734
    %855 = vmatpush.msra.mxu0 %v718
    %856 = vmatpush.msra.mxu0 %v702
    %857 = vmatpush.msra.mxu0 %v686
    %858 = vmatmul.f32.gmra.mxu0 %v814
    %v859 = vpop.f32.mrf.mxu0
    %v860 = vadd.f32 %v806, %v859
    %861 = vmatmul.f32.gmra.mxu0 %v817
    %v862 = vpop.f32.mrf.mxu0
    %v863 = vadd.f32 %v811, %v862
    %864 = vdwg.mxu0
    %865 = vmatpush.msra.mxu0 0.0
    %866 = vmatpush.msra.mxu0 0.0
    %867 = vmatpush.msra.mxu0 0.0
    %868 = vmatpush.msra.mxu0 0.0
    %869 = vmatpush.msra.mxu0 0.0
    %870 = vmatpush.msra.mxu0 0.0
    %871 = vmatpush.msra.mxu0 0.0
    %872 = vmatpush.msra.mxu0 %v799
    %873 = vmatpush.msra.mxu0 %v783
    %874 = vmatpush.msra.mxu0 %v767
    %875 = vmatpush.msra.mxu0 %v751
    %876 = vmatpush.msra.mxu0 %v665
    %877 = vmatpush.msra.mxu0 %v735
    %878 = vmatpush.msra.mxu0 %v719
    %879 = vmatpush.msra.mxu0 %v703
    %880 = vmatpush.msra.mxu0 %v687
    %881 = vmatmul.f32.gmra.mxu0 %v814
    %v882 = vpop.f32.mrf.mxu0
    %v883 = vadd.f32 %v806, %v882
    %884 = vmatmul.f32.gmra.mxu0 %v817
    %v885 = vpop.f32.mrf.mxu0
    %v886 = vadd.f32 %v811, %v885
    %887 = vdwg.mxu0
    %888 = vmatpush.msra.mxu0 0.0
    %889 = vmatpush.msra.mxu0 0.0
    %890 = vmatpush.msra.mxu0 0.0
    %891 = vmatpush.msra.mxu0 0.0
    %892 = vmatpush.msra.mxu0 0.0
    %893 = vmatpush.msra.mxu0 0.0
    %894 = vmatpush.msra.mxu0 0.0
    %895 = vmatpush.msra.mxu0 %v800
    %896 = vmatpush.msra.mxu0 %v784
    %897 = vmatpush.msra.mxu0 %v768
    %898 = vmatpush.msra.mxu0 %v752
    %899 = vmatpush.msra.mxu0 %v666
    %900 = vmatpush.msra.mxu0 %v736
    %901 = vmatpush.msra.mxu0 %v720
    %902 = vmatpush.msra.mxu0 %v704
    %903 = vmatpush.msra.mxu0 %v688
    %904 = vmatmul.f32.gmra.mxu0 %v814
    %v905 = vpop.f32.mrf.mxu0
    %v906 = vadd.f32 %v806, %v905
    %907 = vmatmul.f32.gmra.mxu0 %v817
    %v908 = vpop.f32.mrf.mxu0
    %v909 = vadd.f32 %v811, %v908
    %910 = vdwg.mxu0
    %vm911 = vcmp.gt.f32.partialorder %v837, 0.0
    %vm912 = vcmp.gt.f32.partialorder %v860, 0.0
    %vm913 = vcmp.gt.f32.partialorder %v883, 0.0
    %vm914 = vcmp.gt.f32.partialorder %v906, 0.0
    %vm915 = vcmp.gt.f32.partialorder %v840, 0.0
    %vm916 = vcmp.gt.f32.partialorder %v863, 0.0
    %vm917 = vcmp.gt.f32.partialorder %v886, 0.0
    %vm918 = vcmp.gt.f32.partialorder %v909, 0.0
    %v919 = vmul.f32 %v837, 0.05
    %v920 = vmul.f32 %v860, 0.05
    %v921 = vmul.f32 %v883, 0.05
    %v922 = vmul.f32 %v906, 0.05
    %v923 = vmul.f32 %v840, 0.05
    %v924 = vmul.f32 %v863, 0.05
    %v925 = vmul.f32 %v886, 0.05
    %v926 = vmul.f32 %v909, 0.05
    %v927 = vsel %vm911, %v837, %v919
    %v928 = vsel %vm912, %v860, %v920
    %v929 = vsel %vm913, %v883, %v921
    %v930 = vsel %vm914, %v906, %v922
    %v931 = vsel %vm915, %v840, %v923
    %v932 = vsel %vm916, %v863, %v924
    %v933 = vsel %vm917, %v886, %v925
    %v934 = vsel %vm918, %v909, %v926
    %v935 = vld [vmem:[#allocation7] sm:$0xff]
    %936 = vrot.lane.b32.xlu0 %v927, 17
    %v937 = vpop.permute.xlu0 %936
    %938 = vrot.lane.b32.xlu0 %v928, 17
    %v939 = vpop.permute.xlu0 %938
    %940 = vrot.lane.b32.xlu0 %v929, 17
    %v941 = vpop.permute.xlu0 %940
    %942 = vrot.lane.b32.xlu0 %v930, 17
    %v943 = vpop.permute.xlu0 %942
    %v944 = vsel %vm112, %v941, %v943
    %v945 = vsel %vm112, %v939, %v941
    %v946 = vsel %vm112, %v937, %v939
    %v947 = vsel %vm112, %v943, %v937
    %v948 = vmul.f32 %v947, %v117
    %v949 = vmul.f32 %v946, %v118
    %v950 = vmul.f32 %v945, %v119
    %v951 = vmul.f32 %v944, %v120
    %952 = vrot.lane.b32.xlu0 %v927, 16
    %v953 = vpop.permute.xlu0 %952
    %954 = vrot.lane.b32.xlu0 %v928, 16
    %v955 = vpop.permute.xlu0 %954
    %956 = vrot.lane.b32.xlu0 %v929, 16
    %v957 = vpop.permute.xlu0 %956
    %958 = vrot.lane.b32.xlu0 %v930, 16
    %v959 = vpop.permute.xlu0 %958
    %v960 = vsel %vm133, %v957, %v959
    %v961 = vsel %vm133, %v955, %v957
    %v962 = vsel %vm133, %v953, %v955
    %v963 = vsel %vm133, %v959, %v953
    %v964 = vmul.f32 %v963, %v138
    %v965 = vmul.f32 %v962, %v139
    %v966 = vmul.f32 %v961, %v140
    %v967 = vmul.f32 %v960, %v141
    %968 = vrot.lane.b32.xlu0 %v927, 15
    %v969 = vpop.permute.xlu0 %968
    %970 = vrot.lane.b32.xlu0 %v928, 15
    %v971 = vpop.permute.xlu0 %970
    %972 = vrot.lane.b32.xlu0 %v929, 15
    %v973 = vpop.permute.xlu0 %972
    %974 = vrot.lane.b32.xlu0 %v930, 15
    %v975 = vpop.permute.xlu0 %974
    %v976 = vsel %vm154, %v973, %v975
    %v977 = vsel %vm154, %v971, %v973
    %v978 = vsel %vm154, %v969, %v971
    %v979 = vsel %vm154, %v975, %v969
    %v980 = vmul.f32 %v979, %v159
    %v981 = vmul.f32 %v978, %v160
    %v982 = vmul.f32 %v977, %v161
    %v983 = vmul.f32 %v976, %v162
    %984 = vrot.lane.b32.xlu0 %v927, 1
    %v985 = vpop.permute.xlu0 %984
    %986 = vrot.lane.b32.xlu0 %v928, 1
    %v987 = vpop.permute.xlu0 %986
    %988 = vrot.lane.b32.xlu0 %v929, 1
    %v989 = vpop.permute.xlu0 %988
    %990 = vrot.lane.b32.xlu0 %v930, 1
    %v991 = vpop.permute.xlu0 %990
    %v992 = vsel %vm175, %v989, %v991
    %v993 = vsel %vm175, %v987, %v989
    %v994 = vsel %vm175, %v985, %v987
    %v995 = vsel %vm175, %v991, %v985
    %v996 = vmul.f32 %v995, %v180
    %v997 = vmul.f32 %v994, %v181
    %v998 = vmul.f32 %v993, %v182
    %v999 = vmul.f32 %v992, %v183
    %1000 = vrot.lane.b32.xlu0 %v927, 127
    %v1001 = vpop.permute.xlu0 %1000
    %1002 = vrot.lane.b32.xlu0 %v928, 127
    %v1003 = vpop.permute.xlu0 %1002
    %1004 = vrot.lane.b32.xlu0 %v929, 127
    %v1005 = vpop.permute.xlu0 %1004
    %1006 = vrot.lane.b32.xlu0 %v930, 127
    %v1007 = vpop.permute.xlu0 %1006
    %v1008 = vsel %vm196, %v1005, %v1007
    %v1009 = vsel %vm196, %v1003, %v1005
    %v1010 = vsel %vm196, %v1001, %v1003
    %v1011 = vsel %vm196, %v1007, %v1001
    %v1012 = vmul.f32 %v1010, %v201
    %v1013 = vmul.f32 %v1009, %v202
    %v1014 = vmul.f32 %v1008, %v203
    %v1015 = vmul.f32 %v1011, %v204
    %1016 = vrot.lane.b32.xlu0 %v927, 113
    %v1017 = vpop.permute.xlu0 %1016
    %1018 = vrot.lane.b32.xlu0 %v928, 113
    %v1019 = vpop.permute.xlu0 %1018
    %1020 = vrot.lane.b32.xlu0 %v929, 113
    %v1021 = vpop.permute.xlu0 %1020
    %1022 = vrot.lane.b32.xlu0 %v930, 113
    %v1023 = vpop.permute.xlu0 %1022
    %v1024 = vsel %vm217, %v1021, %v1023
    %v1025 = vsel %vm217, %v1019, %v1021
    %v1026 = vsel %vm217, %v1017, %v1019
    %v1027 = vsel %vm217, %v1023, %v1017
    %v1028 = vmul.f32 %v1026, %v222
    %v1029 = vmul.f32 %v1025, %v223
    %v1030 = vmul.f32 %v1024, %v224
    %v1031 = vmul.f32 %v1027, %v225
    %1032 = vrot.lane.b32.xlu0 %v927, 112
    %v1033 = vpop.permute.xlu0 %1032
    %1034 = vrot.lane.b32.xlu0 %v928, 112
    %v1035 = vpop.permute.xlu0 %1034
    %1036 = vrot.lane.b32.xlu0 %v929, 112
    %v1037 = vpop.permute.xlu0 %1036
    %1038 = vrot.lane.b32.xlu0 %v930, 112
    %v1039 = vpop.permute.xlu0 %1038
    %v1040 = vsel %vm238, %v1037, %v1039
    %v1041 = vsel %vm238, %v1035, %v1037
    %v1042 = vsel %vm238, %v1033, %v1035
    %v1043 = vsel %vm238, %v1039, %v1033
    %v1044 = vmul.f32 %v1042, %v243
    %v1045 = vmul.f32 %v1041, %v244
    %v1046 = vmul.f32 %v1040, %v245
    %v1047 = vmul.f32 %v1043, %v246
    %1048 = vrot.lane.b32.xlu0 %v927, 111
    %v1049 = vpop.permute.xlu0 %1048
    %1050 = vrot.lane.b32.xlu0 %v928, 111
    %v1051 = vpop.permute.xlu0 %1050
    %1052 = vrot.lane.b32.xlu0 %v929, 111
    %v1053 = vpop.permute.xlu0 %1052
    %1054 = vrot.lane.b32.xlu0 %v930, 111
    %v1055 = vpop.permute.xlu0 %1054
    %v1056 = vsel %vm259, %v1053, %v1055
    %v1057 = vsel %vm259, %v1051, %v1053
    %v1058 = vsel %vm259, %v1049, %v1051
    %v1059 = vsel %vm259, %v1055, %v1049
    %v1060 = vmul.f32 %v1058, %v264
    %v1061 = vmul.f32 %v1057, %v265
    %v1062 = vmul.f32 %v1056, %v266
    %v1063 = vmul.f32 %v1059, %v267
    %v1064 = vld [vmem:[%s9] sm:$0xff]
    %1066 = vset.pattern.permute.xlu0 0
    %1067 = vperm.xlu0 %1066, %v1064
    %v1068 = vpop.permute.xlu0 %1067
    %v1071 = vsel %vm284, %v935, 0
    %1073 = vmatpush.msra.mxu0 0.0
    %1074 = vmatpush.msra.mxu0 0.0
    %1075 = vmatpush.msra.mxu0 0.0
    %1076 = vmatpush.msra.mxu0 0.0
    %1077 = vmatpush.msra.mxu0 0.0
    %1078 = vmatpush.msra.mxu0 0.0
    %1079 = vmatpush.msra.mxu0 0.0
    %1080 = vmatpush.msra.mxu0 %v1060
    %1081 = vmatpush.msra.mxu0 %v1044
    %1082 = vmatpush.msra.mxu0 %v1028
    %1083 = vmatpush.msra.mxu0 %v1012
    %1084 = vmatpush.msra.mxu0 %v927
    %1085 = vmatpush.msra.mxu0 %v996
    %1086 = vmatpush.msra.mxu0 %v980
    %1087 = vmatpush.msra.mxu0 %v964
    %1088 = vmatpush.msra.mxu0 %v948
    %1089 = vmatmul.f32.gmra.mxu0 %v1071
    %v1090 = vpop.f32.mrf.mxu0
    %v1091 = vadd.f32 %v1068, %v1090
    %1092 = vdwg.mxu0
    %1093 = vmatpush.msra.mxu0 0.0
    %1094 = vmatpush.msra.mxu0 0.0
    %1095 = vmatpush.msra.mxu0 0.0
    %1096 = vmatpush.msra.mxu0 0.0
    %1097 = vmatpush.msra.mxu0 0.0
    %1098 = vmatpush.msra.mxu0 0.0
    %1099 = vmatpush.msra.mxu0 0.0
    %1100 = vmatpush.msra.mxu0 %v1061
    %1101 = vmatpush.msra.mxu0 %v1045
    %1102 = vmatpush.msra.mxu0 %v1029
    %1103 = vmatpush.msra.mxu0 %v1013
    %1104 = vmatpush.msra.mxu0 %v928
    %1105 = vmatpush.msra.mxu0 %v997
    %1106 = vmatpush.msra.mxu0 %v981
    %1107 = vmatpush.msra.mxu0 %v965
    %1108 = vmatpush.msra.mxu0 %v949
    %1109 = vmatmul.f32.gmra.mxu0 %v1071
    %v1110 = vpop.f32.mrf.mxu0
    %v1111 = vadd.f32 %v1068, %v1110
    %1112 = vdwg.mxu0
    %1113 = vmatpush.msra.mxu0 0.0
    %1114 = vmatpush.msra.mxu0 0.0
    %1115 = vmatpush.msra.mxu0 0.0
    %1116 = vmatpush.msra.mxu0 0.0
    %1117 = vmatpush.msra.mxu0 0.0
    %1118 = vmatpush.msra.mxu0 0.0
    %1119 = vmatpush.msra.mxu0 0.0
    %1120 = vmatpush.msra.mxu0 %v1062
    %1121 = vmatpush.msra.mxu0 %v1046
    %1122 = vmatpush.msra.mxu0 %v1030
    %1123 = vmatpush.msra.mxu0 %v1014
    %1124 = vmatpush.msra.mxu0 %v929
    %1125 = vmatpush.msra.mxu0 %v998
    %1126 = vmatpush.msra.mxu0 %v982
    %1127 = vmatpush.msra.mxu0 %v966
    %1128 = vmatpush.msra.mxu0 %v950
    %1129 = vmatmul.f32.gmra.mxu0 %v1071
    %v1130 = vpop.f32.mrf.mxu0
    %v1131 = vadd.f32 %v1068, %v1130
    %1132 = vdwg.mxu0
    %1133 = vmatpush.msra.mxu0 0.0
    %1134 = vmatpush.msra.mxu0 0.0
    %1135 = vmatpush.msra.mxu0 0.0
    %1136 = vmatpush.msra.mxu0 0.0
    %1137 = vmatpush.msra.mxu0 0.0
    %1138 = vmatpush.msra.mxu0 0.0
    %1139 = vmatpush.msra.mxu0 0.0
    %1140 = vmatpush.msra.mxu0 %v1063
    %1141 = vmatpush.msra.mxu0 %v1047
    %1142 = vmatpush.msra.mxu0 %v1031
    %1143 = vmatpush.msra.mxu0 %v1015
    %1144 = vmatpush.msra.mxu0 %v930
    %1145 = vmatpush.msra.mxu0 %v999
    %1146 = vmatpush.msra.mxu0 %v983
    %1147 = vmatpush.msra.mxu0 %v967
    %1148 = vmatpush.msra.mxu0 %v951
    %1149 = vmatmul.f32.gmra.mxu0 %v1071
    %v1150 = vpop.f32.mrf.mxu0
    %v1151 = vadd.f32 %v1068, %v1150
    %1152 = vdwg.mxu0
    %v1153 = vld [vmem:[%s10] sm:$0xff]
    %v1154 = vld [vmem:[%s11] sm:$0xff]
    %1156 = vset.pattern.permute.xlu0 0
    %1157 = vperm.xlu0 %1156, %v1154
    %v1158 = vpop.permute.xlu0 %1157
    %vm1160 = vcmask 261120
    %v1162 = vsel %vm1160, %v1153, 0
    %1164 = vmatpush.msra.mxu0 0.0
    %1165 = vmatpush.msra.mxu0 0.0
    %1166 = vmatpush.msra.mxu0 0.0
    %1167 = vmatpush.msra.mxu0 0.0
    %1168 = vmatpush.msra.mxu0 0.0
    %1169 = vmatpush.msra.mxu0 0.0
    %1170 = vmatpush.msra.mxu0 0.0
    %1171 = vmatpush.msra.mxu0 0.0
    %1172 = vmatpush.msra.mxu0 0.0
    %1173 = vmatpush.msra.mxu0 0.0
    %1174 = vmatpush.msra.mxu0 0.0
    %1175 = vmatpush.msra.mxu0 0.0
    %1176 = vmatpush.msra.mxu0 %v1091
    %1177 = vmatpush.msra.mxu0 %v931
    %1178 = vmatpush.msra.mxu0 %v667
    %1179 = vmatpush.msra.mxu0 %v403
    %1180 = vmatmul.f32.gmra.mxu0 %v1162
    %v1181 = vpop.f32.mrf.mxu0
    %v1182 = vadd.f32 %v1158, %v1181
    %1183 = vdwg.mxu0
    %1184 = vmatpush.msra.mxu0 0.0
    %1185 = vmatpush.msra.mxu0 0.0
    %1186 = vmatpush.msra.mxu0 0.0
    %1187 = vmatpush.msra.mxu0 0.0
    %1188 = vmatpush.msra.mxu0 0.0
    %1189 = vmatpush.msra.mxu0 0.0
    %1190 = vmatpush.msra.mxu0 0.0
    %1191 = vmatpush.msra.mxu0 0.0
    %1192 = vmatpush.msra.mxu0 0.0
    %1193 = vmatpush.msra.mxu0 0.0
    %1194 = vmatpush.msra.mxu0 0.0
    %1195 = vmatpush.msra.mxu0 0.0
    %1196 = vmatpush.msra.mxu0 %v1111
    %1197 = vmatpush.msra.mxu0 %v932
    %1198 = vmatpush.msra.mxu0 %v668
    %1199 = vmatpush.msra.mxu0 %v404
    %1200 = vmatmul.f32.gmra.mxu0 %v1162
    %v1201 = vpop.f32.mrf.mxu0
    %v1202 = vadd.f32 %v1158, %v1201
    %1203 = vdwg.mxu0
    %1204 = vmatpush.msra.mxu0 0.0
    %1205 = vmatpush.msra.mxu0 0.0
    %1206 = vmatpush.msra.mxu0 0.0
    %1207 = vmatpush.msra.mxu0 0.0
    %1208 = vmatpush.msra.mxu0 0.0
    %1209 = vmatpush.msra.mxu0 0.0
    %1210 = vmatpush.msra.mxu0 0.0
    %1211 = vmatpush.msra.mxu0 0.0
    %1212 = vmatpush.msra.mxu0 0.0
    %1213 = vmatpush.msra.mxu0 0.0
    %1214 = vmatpush.msra.mxu0 0.0
    %1215 = vmatpush.msra.mxu0 0.0
    %1216 = vmatpush.msra.mxu0 %v1131
    %1217 = vmatpush.msra.mxu0 %v933
    %1218 = vmatpush.msra.mxu0 %v669
    %1219 = vmatpush.msra.mxu0 %v405
    %1220 = vmatmul.f32.gmra.mxu0 %v1162
    %v1221 = vpop.f32.mrf.mxu0
    %v1222 = vadd.f32 %v1158, %v1221
    %1223 = vdwg.mxu0
    %1224 = vmatpush.msra.mxu0 0.0
    %1225 = vmatpush.msra.mxu0 0.0
    %1226 = vmatpush.msra.mxu0 0.0
    %1227 = vmatpush.msra.mxu0 0.0
    %1228 = vmatpush.msra.mxu0 0.0
    %1229 = vmatpush.msra.mxu0 0.0
    %1230 = vmatpush.msra.mxu0 0.0
    %1231 = vmatpush.msra.mxu0 0.0
    %1232 = vmatpush.msra.mxu0 0.0
    %1233 = vmatpush.msra.mxu0 0.0
    %1234 = vmatpush.msra.mxu0 0.0
    %1235 = vmatpush.msra.mxu0 0.0
    %1236 = vmatpush.msra.mxu0 %v1151
    %1237 = vmatpush.msra.mxu0 %v934
    %1238 = vmatpush.msra.mxu0 %v670
    %1239 = vmatpush.msra.mxu0 %v406
    %1240 = vmatmul.f32.gmra.mxu0 %v1162
    %v1241 = vpop.f32.mrf.mxu0
    %v1242 = vadd.f32 %v1158, %v1241
    %1243 = vdwg.mxu0
    %v1244 = vadd.f32 %v1182, %v87
    %v1245 = vadd.f32 %v1202, %v88
    %v1246 = vadd.f32 %v1222, %v90
    %v1247 = vadd.f32 %v1242, %v91
    %1248 = vst [vmem:[#allocation8] sm:$0xff] %v1244
    %1249 = vst [vmem:[#allocation8 + $0x8] sm:$0xff] %v1245
    %s1250 = scalar_lea.vmem [#allocation8], 16
    %1251 = vst [vmem:[%s1250] sm:$0xff] %v1246
    %1252 = vst [vmem:[%s1250 + $0x8] sm:$0xff] %v1247
    // Predicated region
    $region62: #{tpu_custom_call.1} parent=1 // pred_check
      _
    $region63: #{tpu_custom_call.1} parent=1 // pred_check_branch
      %1254 = sbr.rel (0) target = $region65
    $region64: #{tpu_custom_call.1} parent=1 // pred_region
      %1256 = vsyncadd [#allocation4], 0
      %s1257 = sshll.u32 [#allocation8], 4
      %s1258 = int_to_ptr.vmem [resolvable:$true] %s1257
      %s1259 = sshll.u32 %s12, 4
      %s1260 = int_to_ptr.hbm [resolvable:$true] %s1259
      %1265 = dma.vmem_to_hbm [thread:$0]  %s1258, 512, %s1260, [#allocation4], 256, 256, 16
    $region65: #{tpu_custom_call.1} parent=1 // pred_fallthru
      _
    // Predicated region
    $region66: #{tpu_custom_call.1} parent=1 // pred_check
      _
    $region67: #{tpu_custom_call.1} parent=1 // pred_check_branch
      %1267 = sbr.rel (0) target = $region69
    $region68: #{tpu_custom_call.1} parent=1 // pred_region
      %1269 = dma.done [#allocation4], 512
    $region69: #{tpu_custom_call.1} parent=1 // pred_fallthru
      _
    %1270 = vsyncpa [#allocation3], 1
    %1271 = vsyncpa [#allocation6], 1
    %1272 = vsyncpa [#allocation4], 1

</llo_original>
